<compile_context>
chip_gen: v7x
topology: tpu7x:2x2x1
jax: 0.10.0
libtpu: 0.0.40
codegen_flags: <defaults>
</compile_context>

<pallas_src>
import jax
import jax.numpy as jnp
import numpy as np
from jax.experimental import pallas as pl
from jax.experimental.pallas import tpu as pltpu


def decoder_kernel(gi_ref, h_ref, enc_ref,
                   w_hh_ref, b_hh_ref,
                   wc1_ref, wc2_ref, bc_ref,
                   w_out_ref, b_out_ref,
                   logits_ref, hid_ref, concat_sc):
    Hp = h_ref.shape[1]

    # GRU / attention / concat do not depend on the vocab tile: run once per core on
    # the first vocab step, keep the result resident in VMEM scratch for all tiles.
    @pl.when(pl.program_id(1) == 0)
    def _():
        gi = gi_ref[...]                                  # (B, 3Hp) f32, x @ w_ih^T + b_ih
        h = h_ref[...]                                    # (B, Hp)  f32 previous hidden
        enc = enc_ref[...]                                # (B, S, Hp) bf16 encoder outs

        # ---- GRU cell (PyTorch gate order r, z, n): bf16 MXU, f32 accumulation ----
        gh = jnp.dot(h.astype(jnp.bfloat16), w_hh_ref[...],
                     preferred_element_type=jnp.float32) + b_hh_ref[...]     # (B, 3Hp)
        r = jax.nn.sigmoid(gi[:, :Hp] + gh[:, :Hp])
        z = jax.nn.sigmoid(gi[:, Hp:2 * Hp] + gh[:, Hp:2 * Hp])
        n = jnp.tanh(gi[:, 2 * Hp:] + r * gh[:, 2 * Hp:])
        rnn_out = (1.0 - z) * n + z * h                   # (B, Hp) f32
        hid_ref[...] = rnn_out

        # ---- dot attention on the MXU (batched matmuls, single query token) ----
        rnn_bf = rnn_out.astype(jnp.bfloat16)
        q = rnn_bf.reshape(rnn_bf.shape[0], 1, Hp)        # (B, 1, Hp)
        scores = jnp.einsum("bqh,bsh->bqs", q, enc,
                            preferred_element_type=jnp.float32)              # (B, 1, S)
        scores = scores - jnp.max(scores, axis=-1, keepdims=True)
        e = jnp.exp(scores)
        attn = e * pl.reciprocal(jnp.sum(e, axis=-1, keepdims=True), approx=True)
        context = jnp.einsum("bqs,bsh->bqh", attn.astype(jnp.bfloat16), enc,
                             preferred_element_type=jnp.float32)             # (B, 1, Hp)
        context_bf = context.reshape(context.shape[0], Hp).astype(jnp.bfloat16)

        # ---- concat Linear + tanh as two matmuls summed (no (B,2Hp) relayout) ----
        concat_out = jnp.tanh(
            jnp.dot(rnn_bf, wc1_ref[...], preferred_element_type=jnp.float32)
            + jnp.dot(context_bf, wc2_ref[...], preferred_element_type=jnp.float32)
            + bc_ref[...])
        concat_sc[...] = concat_out.astype(jnp.bfloat16)

    # ---- output Linear for this vocab tile (lane-dense (B, tv) store) ----
    logits_ref[...] = (
        jnp.dot(concat_sc[...], w_out_ref[...], preferred_element_type=jnp.float32)
        + b_out_ref[...])


def _round_up(x, m):
    return ((x + m - 1) // m) * m


def _pad2(a, rows, cols):
    return jnp.pad(a, ((0, rows - a.shape[0]), (0, cols - a.shape[1])))


def luong_decoder_forward(input_step, last_hidden, encoder_outputs, params, *,
                          vocab_tile=2048, core_splits=2):
    """input_step: (1,B) int32; last_hidden: (1,B,H); encoder_outputs: (S,B,H)."""
    f32, bf16 = jnp.float32, jnp.bfloat16
    S, B, H = encoder_outputs.shape
    V = params["w_out"].shape[0]

    Bp = _round_up(max(B, 8), 8)                 # sublane-dense batch
    Hp = _round_up(H, 128)                       # lane-dense hidden
    tv = min(vocab_tile, _round_up(V, 128))      # lane-dense vocab tile
    NC = max(1, int(core_splits))                # vocab split across TensorCores
    nV = pl.cdiv(V, tv)
    nVh = pl.cdiv(nV, NC)                        # vocab tiles handled per core
    Vp = NC * nVh * tv

    # ---- embedding lookup (tiny gather) + eval-mode dropout (= identity) ----
    embedded = params["embedding"][input_step[0]]                       # (B, H) f32
    h_p = _pad2(last_hidden[0], Bp, Hp).astype(f32)                     # (Bp, Hp)

    # ---- input projection in the wrapper: gi = x @ w_ih^T + b_ih (B,3H) ----
    # Removes the (Hp,3Hp) w_ih stream from the kernel entirely (largest constant DMA
    # after w_out); gate blocks [r|z|n] are padded to Hp columns each.
    gi = jnp.dot(embedded.astype(bf16), params["w_ih"].T.astype(bf16),
                 preferred_element_type=f32) + params["b_ih"]           # (B, 3H)
    gi_p = jnp.concatenate(
        [_pad2(gi[:, g * H:(g + 1) * H], Bp, Hp) for g in range(3)], axis=1)

    # ---- encoder outputs: (S,B,H) -> (B,S,H) so attention is a batched MXU dot ----
    enc = jnp.transpose(encoder_outputs, (1, 0, 2))
    enc_p = jnp.pad(enc, ((0, Bp - B), (0, 0), (0, Hp - H))).astype(bf16)

    # ---- GRU hidden weights: pre-transposed (Hp,3Hp), gate blocks padded to Hp ----
    def gru_w(w):     # (3H, H) -> (Hp, 3*Hp), gate blocks [r|z|n] along columns
        gates = [_pad2(w[g * H:(g + 1) * H, :].T, Hp, Hp) for g in range(3)]
        return jnp.concatenate(gates, axis=1).astype(bf16)

    def gru_b(b):     # (3H,) -> (1, 3*Hp)
        gates = [jnp.pad(b[g * H:(g + 1) * H], (0, Hp - H)) for g in range(3)]
        return jnp.concatenate(gates)[None, :].astype(f32)

    w_hh_t = gru_w(params["w_hh"])
    b_hh_p = gru_b(params["b_hh"])

    # ---- concat Linear: split pre-transposed weight (rnn half / context half) ----
    wc = params["w_concat"]                                             # (H, 2H)
    wc1_t = _pad2(wc[:, :H].T, Hp, Hp).astype(bf16)
    wc2_t = _pad2(wc[:, H:].T, Hp, Hp).astype(bf16)
    b_concat_p = jnp.pad(params["b_concat"], (0, Hp - H))[None, :].astype(f32)

    # ---- output Linear: pre-transposed (Hp, Vp), tiled over the vocab ----
    w_out_t = _pad2(params["w_out"].T, Hp, Vp).astype(bf16)
    b_out_p = jnp.pad(params["b_out"], (0, Vp - V))[None, :].astype(f32)

    # ---- VMEM budget: single-buffered constants + double-buffered vocab tiles ----
    def _nb(shape, dt):
        n = 1
        for d in shape:
            n *= int(d)
        return n * jnp.dtype(dt).itemsize

    const_bytes = (_nb((Bp, 3 * Hp), f32) + _nb((Bp, Hp), f32)
                   + _nb((Bp, S, Hp), bf16)
                   + _nb((Hp, 3 * Hp), bf16) + _nb((1, 3 * Hp), f32)
                   + 2 * _nb((Hp, Hp), bf16) + _nb((1, Hp), f32))
    streamed = _nb((Hp, tv), bf16) + _nb((1, tv), f32) + _nb((Bp, tv), f32)
    resident_out = _nb((Bp, Hp), f32)                     # hidden output block
    scratch = _nb((Bp, Hp), bf16)                         # concat_out scratch
    vmem_limit = int(min(48 << 20,
                         max(16 << 20,
                             const_bytes + 2 * streamed + 2 * resident_out
                             + scratch + (2 << 20))))

    one = pl.Buffered(1)                                  # fetched once: no double buffer
    c2 = lambda c, j: (0, 0)
    c3 = lambda c, j: (0, 0, 0)
    vt = lambda c, j: (0, c * nVh + j)                    # vocab tile for this core/step

    logits, hid = pl.pallas_call(
        decoder_kernel,
        out_shape=(jax.ShapeDtypeStruct((Bp, Vp), f32),
                   jax.ShapeDtypeStruct((NC * Bp, Hp), f32)),
        grid_spec=pltpu.PrefetchScalarGridSpec(
            num_scalar_prefetch=0,
            grid=(NC, nVh),
            in_specs=[
                pl.BlockSpec((Bp, 3 * Hp), c2, pipeline_mode=one),   # gi (f32)
                pl.BlockSpec((Bp, Hp), c2, pipeline_mode=one),       # prev hidden (f32)
                pl.BlockSpec((Bp, S, Hp), c3, pipeline_mode=one),    # encoder outs (bf16)
                pl.BlockSpec((Hp, 3 * Hp), c2, pipeline_mode=one),   # w_hh^T
                pl.BlockSpec((1, 3 * Hp), c2, pipeline_mode=one),    # b_hh
                pl.BlockSpec((Hp, Hp), c2, pipeline_mode=one),       # w_concat^T (rnn half)
                pl.BlockSpec((Hp, Hp), c2, pipeline_mode=one),       # w_concat^T (ctx half)
                pl.BlockSpec((1, Hp), c2, pipeline_mode=one),        # b_concat
                pl.BlockSpec((Hp, tv), vt),                          # w_out^T vocab tile
                pl.BlockSpec((1, tv), vt),                           # b_out vocab tile
            ],
            out_specs=(
                pl.BlockSpec((Bp, tv), vt),                          # logits vocab tile
                pl.BlockSpec((Bp, Hp), lambda c, j: (c, 0)),         # new hidden (per core)
            ),
            scratch_shapes=[pltpu.VMEM((Bp, Hp), bf16)],             # concat_out, resident
        ),
        compiler_params=pltpu.CompilerParams(
            # leading axis sharded across TensorCores on v7x; vocab axis carries the
            # resident concat_sc / hidden block so it stays "arbitrary".
            dimension_semantics=("parallel", "arbitrary"),
            vmem_limit_bytes=vmem_limit),
    )(gi_p, h_p, enc_p, w_hh_t, b_hh_p, wc1_t, wc2_t, b_concat_p, w_out_t, b_out_p)

    # Final softmax over the (unpadded) vocab in plain JAX — the kernel only sees one
    # vocab tile at a time; padded rows/columns are sliced away first.  Core 0's copy
    # of the hidden state lives in the first Bp rows.
    output = jax.nn.softmax(logits[:B, :V], axis=1)
    hidden = hid[:B, :H][None]
    return output, hidden


def reference_forward(input_step, last_hidden, encoder_outputs, params):
    """Pure-JAX reference mirroring the PyTorch forward (eval mode), with the same
    bf16 weight/activation rounding points the kernel uses."""
    f32, bf16 = jnp.float32, jnp.bfloat16
    rnd = lambda a: a.astype(bf16).astype(f32)
    H = params["embedding"].shape[1]

    x = rnd(params["embedding"])[input_step[0]]           # (B, H)
    h = last_hidden[0]                                    # (B, H) f32
    enc = rnd(encoder_outputs)                            # (S, B, H)

    gi = x @ rnd(params["w_ih"]).T + params["b_ih"]
    gh = rnd(h) @ rnd(params["w_hh"]).T + params["b_hh"]
    r = jax.nn.sigmoid(gi[:, :H] + gh[:, :H])
    z = jax.nn.sigmoid(gi[:, H:2 * H] + gh[:, H:2 * H])
    n = jnp.tanh(gi[:, 2 * H:] + r * gh[:, 2 * H:])
    rnn_out = (1.0 - z) * n + z * h                       # (B, H)

    scores = jnp.sum(rnd(rnn_out)[None] * enc, axis=2)    # (S, B)
    attn_w = jax.nn.softmax(scores.T, axis=1)             # (B, S)
    context = jnp.einsum("bs,sbh->bh", rnd(attn_w), enc)  # (B, H)

    concat_in = jnp.concatenate([rnd(rnn_out), rnd(context)], axis=1)
    concat_out = jnp.tanh(concat_in @ rnd(params["w_concat"]).T + params["b_concat"])
    logits = rnd(concat_out) @ rnd(params["w_out"]).T + params["b_out"]
    return jax.nn.softmax(logits, axis=1), rnn_out[None]


def init_params(key, hidden_size, output_size):
    ks = jax.random.split(key, 9)
    H, V = hidden_size, output_size
    bound = 1.0 / np.sqrt(H)
    u = lambda k, shape, b: jax.random.uniform(k, shape, jnp.float32, -b, b)
    return {
        "embedding": u(ks[0], (V, H), 1.0),
        "w_ih": u(ks[1], (3 * H, H), bound),
        "w_hh": u(ks[2], (3 * H, H), bound),
        "b_ih": u(ks[3], (3 * H,), bound),
        "b_hh": u(ks[4], (3 * H,), bound),
        "w_concat": u(ks[5], (H, 2 * H), 1.0 / np.sqrt(2 * H)),
        "b_concat": u(ks[6], (H,), 1.0 / np.sqrt(2 * H)),
        "w_out": u(ks[7], (V, H), bound),
        "b_out": u(ks[8], (V,), bound),
    }


def _run_case(key, B, H, S, V, vocab_tile):
    k_par, k_tok, k_hid, k_enc = jax.random.split(key, 4)
    params = init_params(k_par, H, V)
    input_step = jax.random.randint(k_tok, (1, B), 0, V, dtype=jnp.int32)
    last_hidden = jax.random.normal(k_hid, (1, B, H), jnp.float32)
    encoder_outputs = jax.random.normal(k_enc, (S, B, H), jnp.float32)

    out, hidden = luong_decoder_forward(input_step, last_hidden, encoder_outputs,
                                        params, vocab_tile=vocab_tile)
    jax.block_until_ready((out, hidden))

    ref_out, ref_hidden = reference_forward(input_step, last_hidden,
                                            encoder_outputs, params)
    np.testing.assert_allclose(np.asarray(out), np.asarray(ref_out),
                               atol=2e-3, rtol=2e-2)
    np.testing.assert_allclose(np.asarray(hidden), np.asarray(ref_hidden),
                               atol=2e-3, rtol=2e-2)
    assert out.shape == (B, V) and hidden.shape == (1, B, H)


if __name__ == "__main__":
    key = jax.random.PRNGKey(0)
    k1, k2 = jax.random.split(key)

    # Case 1: small shapes from the module spec (single vocab tile).
    _run_case(k1, B=4, H=32, S=8, V=16, vocab_tile=2048)

    # Case 2: exercises the multi-vocab-tile path (nV > 1) and the core-split axis:
    # V=300 with a 128-wide tile -> 3 real tiles split across the parallel axis.
    _run_case(k2, B=4, H=64, S=8, V=300, vocab_tile=128)

    print("KERNEL_OK")
</pallas_src>

<mosaic_0001>
module attributes {stable_mosaic.version = 11 : i64} {
  func.func @decoder_kernel(%arg0: i32, %arg1: i32, %arg2: memref<8x384xf32, #tpu.memory_space<vmem>>, %arg3: memref<8x128xf32, #tpu.memory_space<vmem>>, %arg4: memref<8x8x128xbf16, #tpu.memory_space<vmem>>, %arg5: memref<128x384xbf16, #tpu.memory_space<vmem>>, %arg6: memref<1x384xf32, #tpu.memory_space<vmem>>, %arg7: memref<128x128xbf16, #tpu.memory_space<vmem>>, %arg8: memref<128x128xbf16, #tpu.memory_space<vmem>>, %arg9: memref<1x128xf32, #tpu.memory_space<vmem>>, %arg10: memref<128x128xbf16, #tpu.memory_space<vmem>>, %arg11: memref<1x128xf32, #tpu.memory_space<vmem>>, %arg12: memref<8x128xf32, #tpu.memory_space<vmem>>, %arg13: memref<8x128xf32, #tpu.memory_space<vmem>>, %arg14: memref<8x128xbf16, #tpu.memory_space<vmem>>) attributes {dimension_semantics = [#tpu.dimension_semantics<parallel>, #tpu.dimension_semantics<arbitrary>], iteration_bounds = array<i64: 2, 1>, scalar_prefetch = 0 : i64, scratch_operands = 1 : i64, tpu.core_type = #tpu.core_type<tc>, window_params = [{pipeline_mode = #tpu.pipeline_mode<synchronous>, transform_indices = @transform_0, window_bounds = array<i64: 8, 384>}, {pipeline_mode = #tpu.pipeline_mode<synchronous>, transform_indices = @transform_1, window_bounds = array<i64: 8, 128>}, {pipeline_mode = #tpu.pipeline_mode<synchronous>, transform_indices = @transform_2, window_bounds = array<i64: 8, 8, 128>}, {pipeline_mode = #tpu.pipeline_mode<synchronous>, transform_indices = @transform_3, window_bounds = array<i64: 128, 384>}, {pipeline_mode = #tpu.pipeline_mode<synchronous>, transform_indices = @transform_4, window_bounds = array<i64: 1, 384>}, {pipeline_mode = #tpu.pipeline_mode<synchronous>, transform_indices = @transform_5, window_bounds = array<i64: 128, 128>}, {pipeline_mode = #tpu.pipeline_mode<synchronous>, transform_indices = @transform_6, window_bounds = array<i64: 128, 128>}, {pipeline_mode = #tpu.pipeline_mode<synchronous>, transform_indices = @transform_7, window_bounds = array<i64: 1, 128>}, {transform_indices = @transform_8, window_bounds = array<i64: 128, 128>}, {transform_indices = @transform_9, window_bounds = array<i64: 1, 128>}, {transform_indices = @transform_10, window_bounds = array<i64: 8, 128>}, {transform_indices = @transform_11, window_bounds = array<i64: 8, 128>}]} {
    %c0_i32 = arith.constant 0 : i32
    %0 = arith.cmpi eq, %arg1, %c0_i32 : i32
    %1 = arith.extui %0 : i1 to i32
    %c0_i32_0 = arith.constant 0 : i32
    %2 = arith.cmpi ne, %1, %c0_i32_0 : i32
    scf.if %2 {
      %c0_8 = arith.constant 0 : index
      %c0_9 = arith.constant 0 : index
      %10 = vector.load %arg2[%c0_8, %c0_9] : memref<8x384xf32, #tpu.memory_space<vmem>>, vector<8x384xf32>
      %c0_10 = arith.constant 0 : index
      %c0_11 = arith.constant 0 : index
      %11 = vector.load %arg3[%c0_10, %c0_11] : memref<8x128xf32, #tpu.memory_space<vmem>>, vector<8x128xf32>
      %c0_12 = arith.constant 0 : index
      %c0_13 = arith.constant 0 : index
      %c0_14 = arith.constant 0 : index
      %12 = vector.load %arg4[%c0_12, %c0_13, %c0_14] : memref<8x8x128xbf16, #tpu.memory_space<vmem>>, vector<8x8x128xbf16>
      %13 = arith.truncf %11 : vector<8x128xf32> to vector<8x128xbf16>
      %c0_15 = arith.constant 0 : index
      %c0_16 = arith.constant 0 : index
      %14 = vector.load %arg5[%c0_15, %c0_16] : memref<128x384xbf16, #tpu.memory_space<vmem>>, vector<128x384xbf16>
      %cst_17 = arith.constant dense<0.000000e+00> : vector<8x384xf32>
      %15 = tpu.matmul %13, %14, %cst_17 {dimension_numbers = #tpu.dot_dimension_numbers<[1], [0], [0], [1], [0, 0, 1, 1], [], []>} : vector<8x128xbf16>, vector<128x384xbf16>, vector<8x384xf32> -> vector<8x384xf32>
      %c0_18 = arith.constant 0 : index
      %c0_19 = arith.constant 0 : index
      %16 = vector.load %arg6[%c0_18, %c0_19] : memref<1x384xf32, #tpu.memory_space<vmem>>, vector<1x384xf32>
      %17 = vector.broadcast %16 : vector<1x384xf32> to vector<8x384xf32>
      %18 = arith.addf %15, %17 : vector<8x384xf32>
      %19 = vector.extract_strided_slice %10 {offsets = [0, 0], sizes = [8, 128], strides = [1, 1]} : vector<8x384xf32> to vector<8x128xf32>
      %20 = vector.extract_strided_slice %18 {offsets = [0, 0], sizes = [8, 128], strides = [1, 1]} : vector<8x384xf32> to vector<8x128xf32>
      %21 = arith.addf %19, %20 : vector<8x128xf32>
      %22 = arith.negf %21 : vector<8x128xf32>
      %23 = math.exp %22 : vector<8x128xf32>
      %cst_20 = arith.constant 1.000000e+00 : f32
      %24 = vector.broadcast %cst_20 : f32 to vector<8x128xf32>
      %25 = arith.addf %24, %23 : vector<8x128xf32>
      %26 = arith.divf %24, %25 : vector<8x128xf32>
      %27 = vector.extract_strided_slice %10 {offsets = [0, 128], sizes = [8, 128], strides = [1, 1]} : vector<8x384xf32> to vector<8x128xf32>
      %28 = vector.extract_strided_slice %18 {offsets = [0, 128], sizes = [8, 128], strides = [1, 1]} : vector<8x384xf32> to vector<8x128xf32>
      %29 = arith.addf %27, %28 : vector<8x128xf32>
      %30 = arith.negf %29 : vector<8x128xf32>
      %31 = math.exp %30 : vector<8x128xf32>
      %cst_21 = arith.constant 1.000000e+00 : f32
      %32 = vector.broadcast %cst_21 : f32 to vector<8x128xf32>
      %33 = arith.addf %32, %31 : vector<8x128xf32>
      %34 = arith.divf %32, %33 : vector<8x128xf32>
      %35 = vector.extract_strided_slice %10 {offsets = [0, 256], sizes = [8, 128], strides = [1, 1]} : vector<8x384xf32> to vector<8x128xf32>
      %36 = vector.extract_strided_slice %18 {offsets = [0, 256], sizes = [8, 128], strides = [1, 1]} : vector<8x384xf32> to vector<8x128xf32>
      %37 = arith.mulf %26, %36 : vector<8x128xf32>
      %38 = arith.addf %35, %37 : vector<8x128xf32>
      %39 = math.tanh %38 : vector<8x128xf32>
      %cst_22 = arith.constant 1.000000e+00 : f32
      %40 = vector.broadcast %cst_22 : f32 to vector<8x128xf32>
      %41 = arith.subf %40, %34 : vector<8x128xf32>
      %42 = arith.mulf %41, %39 : vector<8x128xf32>
      %43 = arith.mulf %34, %11 : vector<8x128xf32>
      %44 = arith.addf %42, %43 : vector<8x128xf32>
      %c0_23 = arith.constant 0 : index
      %c0_24 = arith.constant 0 : index
      %45 = vector.load %arg13[%c0_23, %c0_24] : memref<8x128xf32, #tpu.memory_space<vmem>>, vector<8x128xf32>
      tpu.vector_store %arg13[%c0_23, %c0_24], %44 {strides = array<i32>} : memref<8x128xf32, #tpu.memory_space<vmem>>, vector<8x128xf32>,
      %46 = arith.truncf %44 : vector<8x128xf32> to vector<8x128xbf16>
      %47 = vector.shape_cast %46 : vector<8x128xbf16> to vector<8x1x128xbf16>
      "tpu.trace_start"() <{level = 10 : i32, message = "bqh,bsh->bqs"}> : () -> ()
      %cst_25 = arith.constant dense<0.000000e+00> : vector<8x1x8xf32>
      %48 = tpu.matmul %47, %12, %cst_25 {dimension_numbers = #tpu.dot_dimension_numbers<[2], [2], [1], [1], [0, 0, 0, 1, 1, 1], [0], [0]>} : vector<8x1x128xbf16>, vector<8x8x128xbf16>, vector<8x1x8xf32> -> vector<8x1x8xf32>
      "tpu.trace_stop"() : () -> ()
      %cst_26 = arith.constant dense<0xFF800000> : vector<8x1xf32>
      %49 = vector.multi_reduction <maximumf>, %48, %cst_26 [2] : vector<8x1x8xf32> to vector<8x1xf32>
      %50 = vector.shape_cast %49 : vector<8x1xf32> to vector<8x1x1xf32>
      %51 = vector.broadcast %50 : vector<8x1x1xf32> to vector<8x1x8xf32>
      %52 = arith.subf %48, %51 : vector<8x1x8xf32>
      %53 = math.exp %52 : vector<8x1x8xf32>
      %cst_27 = arith.constant dense<0.000000e+00> : vector<8x1xf32>
      %54 = vector.multi_reduction <add>, %53, %cst_27 [2] : vector<8x1x8xf32> to vector<8x1xf32>
      %55 = vector.shape_cast %54 : vector<8x1xf32> to vector<8x1x1xf32>
      %56 = tpu.reciprocal %55 {approx = true} : vector<8x1x1xf32> -> vector<8x1x1xf32>
      %57 = vector.broadcast %56 : vector<8x1x1xf32> to vector<8x1x8xf32>
      %58 = arith.mulf %53, %57 : vector<8x1x8xf32>
      %59 = arith.truncf %58 : vector<8x1x8xf32> to vector<8x1x8xbf16>
      "tpu.trace_start"() <{level = 10 : i32, message = "bqs,bsh->bqh"}> : () -> ()
      %cst_28 = arith.constant dense<0.000000e+00> : vector<8x1x128xf32>
      %60 = tpu.matmul %59, %12, %cst_28 {dimension_numbers = #tpu.dot_dimension_numbers<[2], [1], [1], [2], [0, 0, 0, 1, 1, 2], [0], [0]>} : vector<8x1x8xbf16>, vector<8x8x128xbf16>, vector<8x1x128xf32> -> vector<8x1x128xf32>
      "tpu.trace_stop"() : () -> ()
      %61 = vector.shape_cast %60 : vector<8x1x128xf32> to vector<8x128xf32>
      %62 = arith.truncf %61 : vector<8x128xf32> to vector<8x128xbf16>
      %c0_29 = arith.constant 0 : index
      %c0_30 = arith.constant 0 : index
      %63 = vector.load %arg7[%c0_29, %c0_30] : memref<128x128xbf16, #tpu.memory_space<vmem>>, vector<128x128xbf16>
      %cst_31 = arith.constant dense<0.000000e+00> : vector<8x128xf32>
      %64 = tpu.matmul %46, %63, %cst_31 {dimension_numbers = #tpu.dot_dimension_numbers<[1], [0], [0], [1], [0, 0, 1, 1], [], []>} : vector<8x128xbf16>, vector<128x128xbf16>, vector<8x128xf32> -> vector<8x128xf32>
      %c0_32 = arith.constant 0 : index
      %c0_33 = arith.constant 0 : index
      %65 = vector.load %arg8[%c0_32, %c0_33] : memref<128x128xbf16, #tpu.memory_space<vmem>>, vector<128x128xbf16>
      %cst_34 = arith.constant dense<0.000000e+00> : vector<8x128xf32>
      %66 = tpu.matmul %62, %65, %cst_34 {dimension_numbers = #tpu.dot_dimension_numbers<[1], [0], [0], [1], [0, 0, 1, 1], [], []>} : vector<8x128xbf16>, vector<128x128xbf16>, vector<8x128xf32> -> vector<8x128xf32>
      %67 = arith.addf %64, %66 : vector<8x128xf32>
      %c0_35 = arith.constant 0 : index
      %c0_36 = arith.constant 0 : index
      %68 = vector.load %arg9[%c0_35, %c0_36] : memref<1x128xf32, #tpu.memory_space<vmem>>, vector<1x128xf32>
      %69 = vector.broadcast %68 : vector<1x128xf32> to vector<8x128xf32>
      %70 = arith.addf %67, %69 : vector<8x128xf32>
      %71 = math.tanh %70 : vector<8x128xf32>
      %72 = arith.truncf %71 : vector<8x128xf32> to vector<8x128xbf16>
      %c0_37 = arith.constant 0 : index
      %c0_38 = arith.constant 0 : index
      %73 = vector.load %arg14[%c0_37, %c0_38] : memref<8x128xbf16, #tpu.memory_space<vmem>>, vector<8x128xbf16>
      tpu.vector_store %arg14[%c0_37, %c0_38], %72 {strides = array<i32>} : memref<8x128xbf16, #tpu.memory_space<vmem>>, vector<8x128xbf16>,
    } else {
    }
    %c0 = arith.constant 0 : index
    %c0_1 = arith.constant 0 : index
    %3 = vector.load %arg14[%c0, %c0_1] : memref<8x128xbf16, #tpu.memory_space<vmem>>, vector<8x128xbf16>
    %c0_2 = arith.constant 0 : index
    %c0_3 = arith.constant 0 : index
    %4 = vector.load %arg10[%c0_2, %c0_3] : memref<128x128xbf16, #tpu.memory_space<vmem>>, vector<128x128xbf16>
    %cst = arith.constant dense<0.000000e+00> : vector<8x128xf32>
    %5 = tpu.matmul %3, %4, %cst {dimension_numbers = #tpu.dot_dimension_numbers<[1], [0], [0], [1], [0, 0, 1, 1], [], []>} : vector<8x128xbf16>, vector<128x128xbf16>, vector<8x128xf32> -> vector<8x128xf32>
    %c0_4 = arith.constant 0 : index
    %c0_5 = arith.constant 0 : index
    %6 = vector.load %arg11[%c0_4, %c0_5] : memref<1x128xf32, #tpu.memory_space<vmem>>, vector<1x128xf32>
    %7 = vector.broadcast %6 : vector<1x128xf32> to vector<8x128xf32>
    %8 = arith.addf %5, %7 : vector<8x128xf32>
    %c0_6 = arith.constant 0 : index
    %c0_7 = arith.constant 0 : index
    %9 = vector.load %arg12[%c0_6, %c0_7] : memref<8x128xf32, #tpu.memory_space<vmem>>, vector<8x128xf32>
    tpu.vector_store %arg12[%c0_6, %c0_7], %8 {strides = array<i32>} : memref<8x128xf32, #tpu.memory_space<vmem>>, vector<8x128xf32>,
    return
  }
  func.func @transform_0(%arg0: i32, %arg1: i32) -> (i32, i32) {
    %c0_i32 = arith.constant 0 : i32
    %c0_i32_0 = arith.constant 0 : i32
    %c0_i32_1 = arith.constant 0 : i32
    return %c0_i32, %c0_i32_0 : i32, i32
  }
  func.func @transform_1(%arg0: i32, %arg1: i32) -> (i32, i32) {
    %c0_i32 = arith.constant 0 : i32
    %c0_i32_0 = arith.constant 0 : i32
    %c0_i32_1 = arith.constant 0 : i32
    return %c0_i32, %c0_i32_0 : i32, i32
  }
  func.func @transform_2(%arg0: i32, %arg1: i32) -> (i32, i32, i32) {
    %c0_i32 = arith.constant 0 : i32
    %c0_i32_0 = arith.constant 0 : i32
    %c0_i32_1 = arith.constant 0 : i32
    %c0_i32_2 = arith.constant 0 : i32
    return %c0_i32, %c0_i32_0, %c0_i32_1 : i32, i32, i32
  }
  func.func @transform_3(%arg0: i32, %arg1: i32) -> (i32, i32) {
    %c0_i32 = arith.constant 0 : i32
    %c0_i32_0 = arith.constant 0 : i32
    %c0_i32_1 = arith.constant 0 : i32
    return %c0_i32, %c0_i32_0 : i32, i32
  }
  func.func @transform_4(%arg0: i32, %arg1: i32) -> (i32, i32) {
    %c0_i32 = arith.constant 0 : i32
    %c0_i32_0 = arith.constant 0 : i32
    %c0_i32_1 = arith.constant 0 : i32
    return %c0_i32, %c0_i32_0 : i32, i32
  }
  func.func @transform_5(%arg0: i32, %arg1: i32) -> (i32, i32) {
    %c0_i32 = arith.constant 0 : i32
    %c0_i32_0 = arith.constant 0 : i32
    %c0_i32_1 = arith.constant 0 : i32
    return %c0_i32, %c0_i32_0 : i32, i32
  }
  func.func @transform_6(%arg0: i32, %arg1: i32) -> (i32, i32) {
    %c0_i32 = arith.constant 0 : i32
    %c0_i32_0 = arith.constant 0 : i32
    %c0_i32_1 = arith.constant 0 : i32
    return %c0_i32, %c0_i32_0 : i32, i32
  }
  func.func @transform_7(%arg0: i32, %arg1: i32) -> (i32, i32) {
    %c0_i32 = arith.constant 0 : i32
    %c0_i32_0 = arith.constant 0 : i32
    %c0_i32_1 = arith.constant 0 : i32
    return %c0_i32, %c0_i32_0 : i32, i32
  }
  func.func @transform_8(%arg0: i32, %arg1: i32) -> (i32, i32) {
    %c1_i32 = arith.constant 1 : i32
    %0 = arith.muli %arg0, %c1_i32 : i32
    %1 = arith.addi %0, %arg1 : i32
    %c0_i32 = arith.constant 0 : i32
    %c0_i32_0 = arith.constant 0 : i32
    return %c0_i32, %1 : i32, i32
  }
  func.func @transform_9(%arg0: i32, %arg1: i32) -> (i32, i32) {
    %c1_i32 = arith.constant 1 : i32
    %0 = arith.muli %arg0, %c1_i32 : i32
    %1 = arith.addi %0, %arg1 : i32
    %c0_i32 = arith.constant 0 : i32
    %c0_i32_0 = arith.constant 0 : i32
    return %c0_i32, %1 : i32, i32
  }
  func.func @transform_10(%arg0: i32, %arg1: i32) -> (i32, i32) {
    %c1_i32 = arith.constant 1 : i32
    %0 = arith.muli %arg0, %c1_i32 : i32
    %1 = arith.addi %0, %arg1 : i32
    %c0_i32 = arith.constant 0 : i32
    %c0_i32_0 = arith.constant 0 : i32
    return %c0_i32, %1 : i32, i32
  }
  func.func @transform_11(%arg0: i32, %arg1: i32) -> (i32, i32) {
    %c0_i32 = arith.constant 0 : i32
    %c0_i32_0 = arith.constant 0 : i32
    return %arg0, %c0_i32 : i32, i32
  }
}

</mosaic_0001>

<llo_original>
// kernel: tpu_custom_call.1
$region0: #{tpu_custom_call.1}
  #allocation0 [shape = 'u32[]', space=smem, size = 0x4, offset = 0x4, fixed_abs, tag = 'smem constant byte address 0x4 - core index']
  #allocation1 [shape = 'u32[144,128]{1,0:T(1,128)}', space=vmem, size = 0x12000, scoped, tag = 'internal scratch']
  #allocation2 [shape = 'bf16[8,128]{1,0:T(8,128)(2,1)}', space=vmem, size = 0x800, scoped, tag = 'scratch operand']
  %s0 = inlined_call_operand.hbm [shape: f32[8,384], index: 0, kind: input, shape index: {}]
  %s1 = inlined_call_operand.hbm [shape: f32[8,128], index: 1, kind: input, shape index: {}]
  %s2 = inlined_call_operand.hbm [shape: bf16[8,8,128], index: 2, kind: input, shape index: {}]
  %s3 = inlined_call_operand.hbm [shape: bf16[128,384], index: 3, kind: input, shape index: {}]
  %s4 = inlined_call_operand.vmem [shape: f32[1,384], index: 4, kind: input, shape index: {}]
  %s5 = inlined_call_operand.hbm [shape: bf16[128,128], index: 5, kind: input, shape index: {}]
  %s6 = inlined_call_operand.hbm [shape: bf16[128,128], index: 6, kind: input, shape index: {}]
  %s7 = inlined_call_operand.vmem [shape: f32[1,128], index: 7, kind: input, shape index: {}]
  %s8 = inlined_call_operand.hbm [shape: bf16[128,256], index: 8, kind: input, shape index: {}]
  %s9 = inlined_call_operand.vmem [shape: f32[1,256], index: 9, kind: input, shape index: {}]
  %s10 = inlined_call_operand.hbm [shape: f32[8,256], index: 10, kind: output, shape index: {0}]
  %s11 = inlined_call_operand.hbm [shape: f32[16,128], index: 11, kind: output, shape index: {1}]
  %12 = xla_tuple %s10, %s11
  %s13 = sld [smem:[#allocation0]]
  $region113: #{tpu_custom_call.1} parent=0
    _
  %s15 = ssub.s32 1, %s13
  %s16 = scalar_select 0, %s15, %s13
  $region1: #{tpu_custom_call.1} parent=0
    #allocation3 [shape = 'u8[12288]{0}', space=vmem, size = 0x3000, scoped, tag = 'input window, operand 0, single buffered']
    #allocation4 [shape = 's32[2]{0}', space=sflag, size = 0x8, scoped, tag = 'scoped memory for tpu_custom_call.1']
    #allocation5 [shape = 's32[2]{0}', space=sflag, size = 0x8, scoped, tag = 'scoped memory for tpu_custom_call.1']
    #allocation6 [shape = 'u8[4096]{0}', space=vmem, size = 0x1000, scoped, tag = 'input window, operand 1, single buffered']
    #allocation7 [shape = 's32[1]{0}', space=sflag, size = 0x4, scoped, tag = 'scoped memory for tpu_custom_call.1']
    #allocation8 [shape = 'u8[16384]{0}', space=vmem, size = 0x4000, scoped, tag = 'input window, operand 2, single buffered']
    #allocation9 [shape = 'u8[98304]{0}', space=vmem, size = 0x18000, scoped, tag = 'input window, operand 3, single buffered']
    #allocation10 [shape = 's32[1]{0}', space=sflag, size = 0x4, scoped, tag = 'scoped memory for tpu_custom_call.1']
    #allocation11 [shape = 'u8[32768]{0}', space=vmem, size = 0x8000, scoped, tag = 'input window, operand 5, single buffered']
    #allocation12 [shape = 'u8[32768]{0}', space=vmem, size = 0x8000, scoped, tag = 'input window, operand 6, single buffered']
    #allocation13 [shape = 's32[1]{0}', space=sflag, size = 0x4, scoped, tag = 'scoped memory for tpu_custom_call.1']
    #allocation14 [shape = 'u8[65536]{0}', space=vmem, size = 0x10000, scoped, tag = 'input window, operand 8']
    #allocation15 [shape = 'u8[8192]{0}', space=vmem, size = 0x2000, scoped, tag = 'output window, operand 0']
    #allocation16 [shape = 'u8[8192]{0}', space=vmem, size = 0x2000, scoped, tag = 'output window, operand 1']
    #allocation17 [shape = 's32[2]{0}', space=sflag, size = 0x8, scoped, tag = 'scoped memory for tpu_custom_call.1']
    %17 = vsyncpa [#allocation4], 0
    %18 = vsyncpa [#allocation7], 0
    %19 = vsyncpa [#allocation10], 0
    %20 = vsyncpa [#allocation13], 0
    %21 = vsyncpa [#allocation5], 0
    %s22 = scalar_lea.sflag [#allocation5], 1
    %23 = vsyncpa %s22, 0
    %24 = vsyncpa [#allocation17], 0
    %s25 = scalar_lea.sflag [#allocation17], 1
    %26 = vsyncpa %s25, 0
    loop: start=0, step=1, limit=4
    $region2: #{tpu_custom_call.1} parent=1 // loop_pre_header
      _
    $region3: #{tpu_custom_call.1} parent=1 // loop_header
      %s28 = sphi 0, %s32
      %p29 = scmp.ge.s32.totalorder %s28, 4
      %s35 = sphi 0, %s47
      %s36 = sphi 0, %s43
      %s37 = sphi 0, %s35
      %s38 = sphi 0, %s36
      %s39 = sphi 0, %s37
      %s40 = sphi 0, %s38
      %s48 = sphi 0, %s48
      %s50 = sphi 0, %s48
      %s51 = sphi 0, %s50
      %s65 = sphi 0, %s51
      %s69 = sphi 0, %s69
      %s71 = sphi 0, %s69
      %s72 = sphi 0, %s71
      %s86 = sphi 0, %s72
      %s90 = sphi 0, %s90
      %s92 = sphi 0, %s90
      %s93 = sphi 0, %s92
      %s107 = sphi 0, %s93
      %s111 = sphi 0, %s111
      %s113 = sphi 0, %s111
      %s114 = sphi 0, %s113
      %s128 = sphi 0, %s114
      %s132 = sphi 0, %s132
      %s134 = sphi 0, %s132
      %s135 = sphi 0, %s134
      %s149 = sphi 0, %s135
      %s153 = sphi 0, %s153
      %s155 = sphi 0, %s153
      %s156 = sphi 0, %s155
      %s170 = sphi 0, %s156
      %s174 = sphi 0, %s174
      %s176 = sphi 0, %s174
      %s177 = sphi 0, %s176
      %s191 = sphi 0, %s177
      %s195 = sphi 0, %s195
      %s197 = sphi 0, %s195
      %s198 = sphi 0, %s197
      %s212 = sphi 0, %s198
      %s220 = sphi 0, %s222
      %s223 = sphi 0, %s220
      %s224 = sphi 0, %s223
      %s240 = sphi 0, %s224
      %s248 = sphi 0, %s250
      %s251 = sphi 0, %s248
      %s252 = sphi 0, %s251
      %s268 = sphi 0, %s252
      %s276 = sphi 0, %s278
      %s279 = sphi 0, %s276
      %s280 = sphi 0, %s279
      %s296 = sphi 0, %s280
      %s302 = sphi 0, %s304
      %s305 = sphi 0, %s302
      %s306 = sphi 0, %s305
      %s322 = sphi 0, %s306
    $region4: #{tpu_custom_call.1} parent=1 // loop_header_branch
      %31 = sbr.rel (%p29) target = $region8
    $region5: #{tpu_custom_call.1} parent=1 // loop_body
      %s33 = ssub.s32 %s28, 1
      %s34 = ssub.s32 %s28, 2
      %s41 = sadd.s32 1, %s36
      %p42 = scmp.ge.s32.totalorder %s41, 1
      %s43 = scalar_select %p42, 0, %s41
      %s44 = sadd.s32 1, %s35
      %s45 = scalar_select %p42, %s44, %s35
      %p46 = scmp.ge.s32.totalorder %s45, 2
      %s47 = scalar_select %p46, 0, %s45
      %s49 = sadd.s32 %s48, 1
      %p52 = scmp.eq.s32.totalorder %s28, 1
      %p53 = scmp.ne.s32.totalorder %s48, %s50
      %p54 = scmp.eq.s32.totalorder %s28, 0
      %p55 = por %p53, %p54
      %p56 = scmp.ne.s32.totalorder %s48, %s50
      %p57 = scmp.eq.s32.totalorder %s33, 1
      %p58 = por %p56, %p57
      %p59 = scmp.ne.s32.totalorder %s50, %s51
      %p60 = scmp.eq.s32.totalorder %s33, 0
      %p61 = por %p59, %p60
      %p62 = scmp.ne.s32.totalorder %s50, %s51
      %p63 = scmp.eq.s32.totalorder %s34, 1
      %p64 = por %p62, %p63
      %p66 = scmp.ne.s32.totalorder %s51, %s65
      %p67 = scmp.eq.s32.totalorder %s34, 0
      %p68 = por %p66, %p67
      %s70 = sadd.s32 %s69, 1
      %p73 = scmp.eq.s32.totalorder %s28, 1
      %p74 = scmp.ne.s32.totalorder %s69, %s71
      %p75 = scmp.eq.s32.totalorder %s28, 0
      %p76 = por %p74, %p75
      %p77 = scmp.ne.s32.totalorder %s69, %s71
      %p78 = scmp.eq.s32.totalorder %s33, 1
      %p79 = por %p77, %p78
      %p80 = scmp.ne.s32.totalorder %s71, %s72
      %p81 = scmp.eq.s32.totalorder %s33, 0
      %p82 = por %p80, %p81
      %p83 = scmp.ne.s32.totalorder %s71, %s72
      %p84 = scmp.eq.s32.totalorder %s34, 1
      %p85 = por %p83, %p84
      %p87 = scmp.ne.s32.totalorder %s72, %s86
      %p88 = scmp.eq.s32.totalorder %s34, 0
      %p89 = por %p87, %p88
      %s91 = sadd.s32 %s90, 1
      %p94 = scmp.eq.s32.totalorder %s28, 1
      %p95 = scmp.ne.s32.totalorder %s90, %s92
      %p96 = scmp.eq.s32.totalorder %s28, 0
      %p97 = por %p95, %p96
      %p98 = scmp.ne.s32.totalorder %s90, %s92
      %p99 = scmp.eq.s32.totalorder %s33, 1
      %p100 = por %p98, %p99
      %p101 = scmp.ne.s32.totalorder %s92, %s93
      %p102 = scmp.eq.s32.totalorder %s33, 0
      %p103 = por %p101, %p102
      %p104 = scmp.ne.s32.totalorder %s92, %s93
      %p105 = scmp.eq.s32.totalorder %s34, 1
      %p106 = por %p104, %p105
      %p108 = scmp.ne.s32.totalorder %s93, %s107
      %p109 = scmp.eq.s32.totalorder %s34, 0
      %p110 = por %p108, %p109
      %s112 = sadd.s32 %s111, 1
      %p115 = scmp.eq.s32.totalorder %s28, 1
      %p116 = scmp.ne.s32.totalorder %s111, %s113
      %p117 = scmp.eq.s32.totalorder %s28, 0
      %p118 = por %p116, %p117
      %p119 = scmp.ne.s32.totalorder %s111, %s113
      %p120 = scmp.eq.s32.totalorder %s33, 1
      %p121 = por %p119, %p120
      %p122 = scmp.ne.s32.totalorder %s113, %s114
      %p123 = scmp.eq.s32.totalorder %s33, 0
      %p124 = por %p122, %p123
      %p125 = scmp.ne.s32.totalorder %s113, %s114
      %p126 = scmp.eq.s32.totalorder %s34, 1
      %p127 = por %p125, %p126
      %p129 = scmp.ne.s32.totalorder %s114, %s128
      %p130 = scmp.eq.s32.totalorder %s34, 0
      %p131 = por %p129, %p130
      %s133 = sadd.s32 %s132, 1
      %p136 = scmp.eq.s32.totalorder %s28, 1
      %p137 = scmp.ne.s32.totalorder %s132, %s134
      %p138 = scmp.eq.s32.totalorder %s28, 0
      %p139 = por %p137, %p138
      %p140 = scmp.ne.s32.totalorder %s132, %s134
      %p141 = scmp.eq.s32.totalorder %s33, 1
      %p142 = por %p140, %p141
      %p143 = scmp.ne.s32.totalorder %s134, %s135
      %p144 = scmp.eq.s32.totalorder %s33, 0
      %p145 = por %p143, %p144
      %p146 = scmp.ne.s32.totalorder %s134, %s135
      %p147 = scmp.eq.s32.totalorder %s34, 1
      %p148 = por %p146, %p147
      %p150 = scmp.ne.s32.totalorder %s135, %s149
      %p151 = scmp.eq.s32.totalorder %s34, 0
      %p152 = por %p150, %p151
      %s154 = sadd.s32 %s153, 1
      %p157 = scmp.eq.s32.totalorder %s28, 1
      %p158 = scmp.ne.s32.totalorder %s153, %s155
      %p159 = scmp.eq.s32.totalorder %s28, 0
      %p160 = por %p158, %p159
      %p161 = scmp.ne.s32.totalorder %s153, %s155
      %p162 = scmp.eq.s32.totalorder %s33, 1
      %p163 = por %p161, %p162
      %p164 = scmp.ne.s32.totalorder %s155, %s156
      %p165 = scmp.eq.s32.totalorder %s33, 0
      %p166 = por %p164, %p165
      %p167 = scmp.ne.s32.totalorder %s155, %s156
      %p168 = scmp.eq.s32.totalorder %s34, 1
      %p169 = por %p167, %p168
      %p171 = scmp.ne.s32.totalorder %s156, %s170
      %p172 = scmp.eq.s32.totalorder %s34, 0
      %p173 = por %p171, %p172
      %s175 = sadd.s32 %s174, 1
      %p178 = scmp.eq.s32.totalorder %s28, 1
      %p179 = scmp.ne.s32.totalorder %s174, %s176
      %p180 = scmp.eq.s32.totalorder %s28, 0
      %p181 = por %p179, %p180
      %p182 = scmp.ne.s32.totalorder %s174, %s176
      %p183 = scmp.eq.s32.totalorder %s33, 1
      %p184 = por %p182, %p183
      %p185 = scmp.ne.s32.totalorder %s176, %s177
      %p186 = scmp.eq.s32.totalorder %s33, 0
      %p187 = por %p185, %p186
      %p188 = scmp.ne.s32.totalorder %s176, %s177
      %p189 = scmp.eq.s32.totalorder %s34, 1
      %p190 = por %p188, %p189
      %p192 = scmp.ne.s32.totalorder %s177, %s191
      %p193 = scmp.eq.s32.totalorder %s34, 0
      %p194 = por %p192, %p193
      %s196 = sadd.s32 %s195, 1
      %p199 = scmp.eq.s32.totalorder %s28, 1
      %p200 = scmp.ne.s32.totalorder %s195, %s197
      %p201 = scmp.eq.s32.totalorder %s28, 0
      %p202 = por %p200, %p201
      %p203 = scmp.ne.s32.totalorder %s195, %s197
      %p204 = scmp.eq.s32.totalorder %s33, 1
      %p205 = por %p203, %p204
      %p206 = scmp.ne.s32.totalorder %s197, %s198
      %p207 = scmp.eq.s32.totalorder %s33, 0
      %p208 = por %p206, %p207
      %p209 = scmp.ne.s32.totalorder %s197, %s198
      %p210 = scmp.eq.s32.totalorder %s34, 1
      %p211 = por %p209, %p210
      %p213 = scmp.ne.s32.totalorder %s198, %s212
      %p214 = scmp.eq.s32.totalorder %s34, 0
      %p215 = por %p213, %p214
      %s216 = sadd.s32 %s35, %s36
      %s217 = sadd.s32 %s47, %s43
      %s218 = ssub.s32 %s216, %s217
      %p219 = scmp.eq.s32.totalorder %s218, 0
      %s221 = sadd.s32 %s220, 1
      %s222 = scalar_select %p219, %s220, %s221
      %p225 = pneg %p219
      %p226 = scmp.eq.s32.totalorder %s28, 1
      %p227 = por %p225, %p226
      %p228 = scmp.ne.s32.totalorder %s220, %s223
      %p229 = scmp.eq.s32.totalorder %s28, 0
      %p230 = por %p228, %p229
      %p231 = scmp.ne.s32.totalorder %s220, %s223
      %p232 = scmp.eq.s32.totalorder %s33, 1
      %p233 = por %p231, %p232
      %p234 = scmp.ne.s32.totalorder %s223, %s224
      %p235 = scmp.eq.s32.totalorder %s33, 0
      %p236 = por %p234, %p235
      %p237 = scmp.ne.s32.totalorder %s223, %s224
      %p238 = scmp.eq.s32.totalorder %s34, 1
      %p239 = por %p237, %p238
      %p241 = scmp.ne.s32.totalorder %s224, %s240
      %p242 = scmp.eq.s32.totalorder %s34, 0
      %p243 = por %p241, %p242
      %s244 = sadd.s32 %s35, %s36
      %s245 = sadd.s32 %s47, %s43
      %s246 = ssub.s32 %s244, %s245
      %p247 = scmp.eq.s32.totalorder %s246, 0
      %s249 = sadd.s32 %s248, 1
      %s250 = scalar_select %p247, %s248, %s249
      %p253 = pneg %p247
      %p254 = scmp.eq.s32.totalorder %s28, 1
      %p255 = por %p253, %p254
      %p256 = scmp.ne.s32.totalorder %s248, %s251
      %p257 = scmp.eq.s32.totalorder %s28, 0
      %p258 = por %p256, %p257
      %p259 = scmp.ne.s32.totalorder %s248, %s251
      %p260 = scmp.eq.s32.totalorder %s33, 1
      %p261 = por %p259, %p260
      %p262 = scmp.ne.s32.totalorder %s251, %s252
      %p263 = scmp.eq.s32.totalorder %s33, 0
      %p264 = por %p262, %p263
      %p265 = scmp.ne.s32.totalorder %s251, %s252
      %p266 = scmp.eq.s32.totalorder %s34, 1
      %p267 = por %p265, %p266
      %p269 = scmp.ne.s32.totalorder %s252, %s268
      %p270 = scmp.eq.s32.totalorder %s34, 0
      %p271 = por %p269, %p270
      %s272 = sadd.s32 %s35, %s36
      %s273 = sadd.s32 %s47, %s43
      %s274 = ssub.s32 %s272, %s273
      %p275 = scmp.eq.s32.totalorder %s274, 0
      %s277 = sadd.s32 %s276, 1
      %s278 = scalar_select %p275, %s276, %s277
      %p281 = pneg %p275
      %p282 = scmp.eq.s32.totalorder %s28, 1
      %p283 = por %p281, %p282
      %p284 = scmp.ne.s32.totalorder %s276, %s279
      %p285 = scmp.eq.s32.totalorder %s28, 0
      %p286 = por %p284, %p285
      %p287 = scmp.ne.s32.totalorder %s276, %s279
      %p288 = scmp.eq.s32.totalorder %s33, 1
      %p289 = por %p287, %p288
      %p290 = scmp.ne.s32.totalorder %s279, %s280
      %p291 = scmp.eq.s32.totalorder %s33, 0
      %p292 = por %p290, %p291
      %p293 = scmp.ne.s32.totalorder %s279, %s280
      %p294 = scmp.eq.s32.totalorder %s34, 1
      %p295 = por %p293, %p294
      %p297 = scmp.ne.s32.totalorder %s280, %s296
      %p298 = scmp.eq.s32.totalorder %s34, 0
      %p299 = por %p297, %p298
      %s300 = ssub.s32 %s35, %s47
      %p301 = scmp.eq.s32.totalorder %s300, 0
      %s303 = sadd.s32 %s302, 1
      %s304 = scalar_select %p301, %s302, %s303
      %p307 = pneg %p301
      %p308 = scmp.eq.s32.totalorder %s28, 1
      %p309 = por %p307, %p308
      %p310 = scmp.ne.s32.totalorder %s302, %s305
      %p311 = scmp.eq.s32.totalorder %s28, 0
      %p312 = por %p310, %p311
      %p313 = scmp.ne.s32.totalorder %s302, %s305
      %p314 = scmp.eq.s32.totalorder %s33, 1
      %p315 = por %p313, %p314
      %p316 = scmp.ne.s32.totalorder %s305, %s306
      %p317 = scmp.eq.s32.totalorder %s33, 0
      %p318 = por %p316, %p317
      %p319 = scmp.ne.s32.totalorder %s305, %s306
      %p320 = scmp.eq.s32.totalorder %s34, 1
      %p321 = por %p319, %p320
      %p323 = scmp.ne.s32.totalorder %s306, %s322
      %p324 = scmp.eq.s32.totalorder %s34, 0
      %p325 = por %p323, %p324
      %p326 = scmp.le.s32.totalorder 1, %s28
      %p327 = scmp.lt.s32.totalorder %s28, 3
      %p328 = pnand %p326, %p327
      %p329 = pneg %p328
      // Predicated region
      $region9: #{tpu_custom_call.1} parent=5 // pred_check
        _
      $region10: #{tpu_custom_call.1} parent=5 // pred_check_branch
        %331 = sbr.rel (%p328) target = $region12
      $region11: #{tpu_custom_call.1} parent=5 // pred_region
        %s332 = ssub.s32 %s28, 1
        // Predicated region
        $region13: #{tpu_custom_call.1} parent=11 // pred_check
          %p333 = pneg %p61
        $region14: #{tpu_custom_call.1} parent=11 // pred_check_branch
          %335 = sbr.rel (%p333) target = $region16
        $region15: #{tpu_custom_call.1} parent=11 // pred_region
          %s337 = ssub.s32 384, 384
          %338 = vsyncadd [#allocation4], %s337
          %s340 = sshll.u32 [#allocation3], 4
          %s341 = int_to_ptr.vmem [resolvable:$true] %s340
          %343 = dma.hbm_to_vmem [thread:$0]  %s0, 384, %s341, [#allocation4]
        $region16: #{tpu_custom_call.1} parent=11 // pred_fallthru
          _
        // Predicated region
        $region17: #{tpu_custom_call.1} parent=11 // pred_check
          %p344 = pneg %p82
        $region18: #{tpu_custom_call.1} parent=11 // pred_check_branch
          %346 = sbr.rel (%p344) target = $region20
        $region19: #{tpu_custom_call.1} parent=11 // pred_region
          %s348 = ssub.s32 128, 128
          %349 = vsyncadd [#allocation7], %s348
          %s351 = sshll.u32 [#allocation6], 4
          %s352 = int_to_ptr.vmem [resolvable:$true] %s351
          %354 = dma.hbm_to_vmem [thread:$0]  %s1, 128, %s352, [#allocation7]
        $region20: #{tpu_custom_call.1} parent=11 // pred_fallthru
          _
        // Predicated region
        $region21: #{tpu_custom_call.1} parent=11 // pred_check
          %p355 = pneg %p103
        $region22: #{tpu_custom_call.1} parent=11 // pred_check_branch
          %357 = sbr.rel (%p355) target = $region24
        $region23: #{tpu_custom_call.1} parent=11 // pred_region
          %s359 = ssub.s32 512, 512
          %360 = vsyncadd [#allocation7], %s359
          %s361 = sshll.u32 [#allocation8], 4
          %s362 = int_to_ptr.vmem [resolvable:$true] %s361
          %367 = dma.hbm_to_vmem [thread:$0]  %s2, 512, %s362, [#allocation7], 64, 64, 4
        $region24: #{tpu_custom_call.1} parent=11 // pred_fallthru
          _
        // Predicated region
        $region25: #{tpu_custom_call.1} parent=11 // pred_check
          %p368 = pneg %p124
        $region26: #{tpu_custom_call.1} parent=11 // pred_check_branch
          %370 = sbr.rel (%p368) target = $region28
        $region27: #{tpu_custom_call.1} parent=11 // pred_region
          %s372 = ssub.s32 3072, 3072
          %373 = vsyncadd [#allocation10], %s372
          %s374 = sshll.u32 [#allocation9], 4
          %s375 = int_to_ptr.vmem [resolvable:$true] %s374
          %380 = dma.hbm_to_vmem [thread:$0]  %s3, 3072, %s375, [#allocation10], 192, 192, 12
        $region28: #{tpu_custom_call.1} parent=11 // pred_fallthru
          _
        // Predicated region
        $region29: #{tpu_custom_call.1} parent=11 // pred_check
          %p381 = pneg %p145
        $region30: #{tpu_custom_call.1} parent=11 // pred_check_branch
          %383 = sbr.rel (%p381) target = $region32
        $region31: #{tpu_custom_call.1} parent=11 // pred_region
          _
        $region32: #{tpu_custom_call.1} parent=11 // pred_fallthru
          _
        // Predicated region
        $region33: #{tpu_custom_call.1} parent=11 // pred_check
          %p384 = pneg %p166
        $region34: #{tpu_custom_call.1} parent=11 // pred_check_branch
          %386 = sbr.rel (%p384) target = $region36
        $region35: #{tpu_custom_call.1} parent=11 // pred_region
          %s388 = ssub.s32 1024, 1024
          %389 = vsyncadd [#allocation10], %s388
          %s390 = sshll.u32 [#allocation11], 4
          %s391 = int_to_ptr.vmem [resolvable:$true] %s390
          %396 = dma.hbm_to_vmem [thread:$0]  %s5, 1024, %s391, [#allocation10], 64, 64, 4
        $region36: #{tpu_custom_call.1} parent=11 // pred_fallthru
          _
        // Predicated region
        $region37: #{tpu_custom_call.1} parent=11 // pred_check
          %p397 = pneg %p187
        $region38: #{tpu_custom_call.1} parent=11 // pred_check_branch
          %399 = sbr.rel (%p397) target = $region40
        $region39: #{tpu_custom_call.1} parent=11 // pred_region
          %s401 = ssub.s32 1024, 1024
          %402 = vsyncadd [#allocation13], %s401
          %s403 = sshll.u32 [#allocation12], 4
          %s404 = int_to_ptr.vmem [resolvable:$true] %s403
          %409 = dma.hbm_to_vmem [thread:$0]  %s6, 1024, %s404, [#allocation13], 64, 64, 4
        $region40: #{tpu_custom_call.1} parent=11 // pred_fallthru
          _
        // Predicated region
        $region41: #{tpu_custom_call.1} parent=11 // pred_check
          %p410 = pneg %p208
        $region42: #{tpu_custom_call.1} parent=11 // pred_check_branch
          %412 = sbr.rel (%p410) target = $region44
        $region43: #{tpu_custom_call.1} parent=11 // pred_region
          _
        $region44: #{tpu_custom_call.1} parent=11 // pred_fallthru
          _
      $region12: #{tpu_custom_call.1} parent=5 // pred_fallthru
        _
      %p413 = scmp.lt.s32.totalorder %s28, 2
      // Predicated region
      $region45: #{tpu_custom_call.1} parent=5 // pred_check
        %p414 = pneg %p413
      $region46: #{tpu_custom_call.1} parent=5 // pred_check_branch
        %416 = sbr.rel (%p414) target = $region48
      $region47: #{tpu_custom_call.1} parent=5 // pred_region
        // Predicated region
        $region49: #{tpu_custom_call.1} parent=47 // pred_check
          %p417 = pneg %p230
        $region50: #{tpu_custom_call.1} parent=47 // pred_check_branch
          %419 = sbr.rel (%p417) target = $region52
        $region51: #{tpu_custom_call.1} parent=47 // pred_region
          %s420 = sand.u32 %s28, 1
          %s421 = scalar_lea.sflag [#allocation4], %s420
          %s422 = sand.u32 %s220, 1
          %s423 = smul.addr %s422, 64
          %s424 = scalar_lea.vmem [#allocation14], %s423
          %s425 = sadd.s32 %s35, %s36
          %s427 = ssub.s32 1024, 1024
          %428 = vsyncadd %s421, %s427
          %s429 = smul.addr %s425, 64
          %s430 = scalar_lea.hbm %s8, %s429
          %s431 = sshll.u32 %s424, 4
          %s432 = int_to_ptr.vmem [resolvable:$true] %s431
          %437 = dma.hbm_to_vmem [thread:$0]  %s430, 1024, %s432, %s421, 128, 64, 4
        $region52: #{tpu_custom_call.1} parent=47 // pred_fallthru
          _
        // Predicated region
        $region53: #{tpu_custom_call.1} parent=47 // pred_check
          %p438 = pneg %p258
        $region54: #{tpu_custom_call.1} parent=47 // pred_check_branch
          %440 = sbr.rel (%p438) target = $region56
        $region55: #{tpu_custom_call.1} parent=47 // pred_region
          %s441 = sadd.s32 %s35, %s36
          %p442 = scmp.lt.s32.totalorder %s441, 1
          %s443 = scalar_select %p442, %s441, 1
          %s444 = scalar_lea.vmem %s9, %s443
          %s445 = sadd.s32 %s35, %s36
        $region56: #{tpu_custom_call.1} parent=47 // pred_fallthru
          _
      $region48: #{tpu_custom_call.1} parent=5 // pred_fallthru
        _
      %p446 = scmp.le.s32.totalorder 1, %s28
      %p447 = scmp.lt.s32.totalorder %s28, 3
      %p448 = pnand %p446, %p447
      %p449 = pneg %p448
      // Predicated region
      $region57: #{tpu_custom_call.1} parent=5 // pred_check
        _
      $region58: #{tpu_custom_call.1} parent=5 // pred_check_branch
        %451 = sbr.rel (%p448) target = $region60
      $region59: #{tpu_custom_call.1} parent=5 // pred_region
        %s452 = ssub.s32 %s28, 1
        // Predicated region
        $region61: #{tpu_custom_call.1} parent=59 // pred_check
          %p453 = pneg %p61
        $region62: #{tpu_custom_call.1} parent=59 // pred_check_branch
          %455 = sbr.rel (%p453) target = $region64
        $region63: #{tpu_custom_call.1} parent=59 // pred_region
          %456 = dma.done [#allocation4], 384
        $region64: #{tpu_custom_call.1} parent=59 // pred_fallthru
          _
        // Predicated region
        $region65: #{tpu_custom_call.1} parent=59 // pred_check
          %p457 = pneg %p82
        $region66: #{tpu_custom_call.1} parent=59 // pred_check_branch
          %459 = sbr.rel (%p457) target = $region68
        $region67: #{tpu_custom_call.1} parent=59 // pred_region
          %460 = dma.done [#allocation7], 128
        $region68: #{tpu_custom_call.1} parent=59 // pred_fallthru
          _
        // Predicated region
        $region69: #{tpu_custom_call.1} parent=59 // pred_check
          %p461 = pneg %p103
        $region70: #{tpu_custom_call.1} parent=59 // pred_check_branch
          %463 = sbr.rel (%p461) target = $region72
        $region71: #{tpu_custom_call.1} parent=59 // pred_region
          %464 = dma.done [#allocation7], 512
        $region72: #{tpu_custom_call.1} parent=59 // pred_fallthru
          _
        // Predicated region
        $region73: #{tpu_custom_call.1} parent=59 // pred_check
          %p465 = pneg %p124
        $region74: #{tpu_custom_call.1} parent=59 // pred_check_branch
          %467 = sbr.rel (%p465) target = $region76
        $region75: #{tpu_custom_call.1} parent=59 // pred_region
          %468 = dma.done [#allocation10], 3072
        $region76: #{tpu_custom_call.1} parent=59 // pred_fallthru
          _
        // Predicated region
        $region77: #{tpu_custom_call.1} parent=59 // pred_check
          %p469 = pneg %p166
        $region78: #{tpu_custom_call.1} parent=59 // pred_check_branch
          %471 = sbr.rel (%p469) target = $region80
        $region79: #{tpu_custom_call.1} parent=59 // pred_region
          %472 = dma.done [#allocation10], 1024
        $region80: #{tpu_custom_call.1} parent=59 // pred_fallthru
          _
        // Predicated region
        $region81: #{tpu_custom_call.1} parent=59 // pred_check
          %p473 = pneg %p187
        $region82: #{tpu_custom_call.1} parent=59 // pred_check_branch
          %475 = sbr.rel (%p473) target = $region84
        $region83: #{tpu_custom_call.1} parent=59 // pred_region
          %476 = dma.done [#allocation13], 1024
        $region84: #{tpu_custom_call.1} parent=59 // pred_fallthru
          _
        %s477 = sand.u32 %s33, 1
        %s478 = scalar_lea.sflag [#allocation4], %s477
        %s479 = sand.u32 %s223, 1
        %s480 = smul.addr %s479, 64
        %s481 = scalar_lea.vmem [#allocation14], %s480
        // Predicated region
        $region85: #{tpu_custom_call.1} parent=59 // pred_check
          %p482 = pneg %p236
        $region86: #{tpu_custom_call.1} parent=59 // pred_check_branch
          %484 = sbr.rel (%p482) target = $region88
        $region87: #{tpu_custom_call.1} parent=59 // pred_region
          %485 = dma.done %s478, 1024
        $region88: #{tpu_custom_call.1} parent=59 // pred_fallthru
          _
        %p486 = pneg %p61
        %p487 = pneg %p58
        %p488 = pneg %p82
        %p489 = pneg %p79
        %p490 = pneg %p103
        %p491 = pneg %p100
        %p492 = pneg %p124
        %p493 = pneg %p121
        %p494 = pneg %p145
        %p495 = pneg %p142
        %p496 = pneg %p166
        %p497 = pneg %p163
        %p498 = pneg %p187
        %p499 = pneg %p184
        %p500 = pneg %p208
        %p501 = pneg %p205
        %s502 = sand.u32 %s33, 1
        %s503 = scalar_lea.sflag [#allocation4], %s502
        %s504 = sand.u32 %s223, 1
        %s505 = smul.addr %s504, 64
        %s506 = scalar_lea.vmem [#allocation14], %s505
        %p507 = pneg %p236
        %p508 = pneg %p233
        %s509 = sadd.s32 %s37, %s38
        %p510 = scmp.lt.s32.totalorder %s509, 1
        %s511 = scalar_select %p510, %s509, 1
        %s512 = scalar_lea.vmem %s9, %s511
        %p513 = pneg %p264
        %p514 = pneg %p261
        %p515 = pneg %p292
        %p516 = pneg %p289
        %s517 = sand.u32 %s279, 1
        %s518 = scalar_lea.sflag [#allocation5], %s517
        %s519 = sand.u32 %s279, 1
        %s520 = smul.addr %s519, 8
        %s521 = scalar_lea.vmem [#allocation15], %s520
        %p522 = pneg %p318
        %p523 = pneg %p315
        %s524 = sand.u32 %s305, 1
        %s525 = scalar_lea.sflag [#allocation17], %s524
        %s526 = sand.u32 %s305, 1
        %s527 = smul.addr %s526, 8
        %s528 = scalar_lea.vmem [#allocation16], %s527
        %s529 = sadd.s32 %s37, %s38
        %s530 = sadd.s32 %s37, %s38
        %p531 = scmp.lt.s32.totalorder %s530, 1
        %s532 = scalar_select %p531, %s530, 1
        %s533 = scalar_lea.vmem %s9, %s532
        %s534 = sadd.s32 %s37, %s38
        %s535 = sadd.s32 %s37, %s38
        %p537 = scmp.eq.s32.totalorder %s38, 0
        // Predicated region
        $region89: #{tpu_custom_call.1} parent=59 // pred_check
          %p538 = pneg %p537
        $region90: #{tpu_custom_call.1} parent=59 // pred_check_branch
          %540 = sbr.rel (%p538) target = $region92
        $region91: #{tpu_custom_call.1} parent=59 // pred_region
          %v541 = vld [vmem:[#allocation3] sm:$0xff]
          %v542 = vld [vmem:[#allocation3 + $0x8] sm:$0xff]
          %v543 = vld [vmem:[#allocation3 + $0x10] sm:$0xff]
          %v544 = vld [vmem:[#allocation6] sm:$0xff]
          %v545 = vld [vmem:[#allocation8] sm:$0xf]
          %v546 = vld [vmem:[#allocation8 + $0x4] sm:$0xf]
          %v547 = vld [vmem:[#allocation8 + $0x8] sm:$0xf]
          %v548 = vld [vmem:[#allocation8 + $0xc] sm:$0xf]
          %v549 = vld [vmem:[#allocation8 + $0x10] sm:$0xf]
          %v550 = vld [vmem:[#allocation8 + $0x14] sm:$0xf]
          %v551 = vld [vmem:[#allocation8 + $0x18] sm:$0xf]
          %v552 = vld [vmem:[#allocation8 + $0x1c] sm:$0xf]
          %v553 = vpack.c.bf16 %v544, %v544
          %v554 = vld [vmem:[#allocation9] sm:$0xff]
          %v555 = vld [vmem:[#allocation9 + $0x8] sm:$0xf]
          %v556 = vld [vmem:[#allocation9 + $0xc] sm:$0xff]
          %v557 = vld [vmem:[#allocation9 + $0x14] sm:$0xf]
          %v558 = vld [vmem:[#allocation9 + $0x18] sm:$0xff]
          %v559 = vld [vmem:[#allocation9 + $0x20] sm:$0xf]
          %v560 = vld [vmem:[#allocation9 + $0x24] sm:$0xff]
          %v561 = vld [vmem:[#allocation9 + $0x2c] sm:$0xf]
          %v562 = vld [vmem:[#allocation9 + $0x30] sm:$0xff]
          %v563 = vld [vmem:[#allocation9 + $0x38] sm:$0xf]
          %v564 = vld [vmem:[#allocation9 + $0x3c] sm:$0xff]
          %v565 = vld [vmem:[#allocation9 + $0x44] sm:$0xf]
          %v566 = vld [vmem:[#allocation9 + $0x48] sm:$0xff]
          %v567 = vld [vmem:[#allocation9 + $0x50] sm:$0xf]
          %v568 = vld [vmem:[#allocation9 + $0x54] sm:$0xff]
          %v569 = vld [vmem:[#allocation9 + $0x5c] sm:$0xf]
          %v570 = vld [vmem:[#allocation9 + $0x60] sm:$0xff]
          %v571 = vld [vmem:[#allocation9 + $0x68] sm:$0xf]
          %v572 = vld [vmem:[#allocation9 + $0x6c] sm:$0xff]
          %v573 = vld [vmem:[#allocation9 + $0x74] sm:$0xf]
          %v574 = vld [vmem:[#allocation9 + $0x78] sm:$0xff]
          %v575 = vld [vmem:[#allocation9 + $0x80] sm:$0xf]
          %v576 = vld [vmem:[#allocation9 + $0x84] sm:$0xff]
          %v577 = vld [vmem:[#allocation9 + $0x8c] sm:$0xf]
          %v578 = vld [vmem:[#allocation9 + $0x90] sm:$0xff]
          %v579 = vld [vmem:[#allocation9 + $0x98] sm:$0xf]
          %v580 = vld [vmem:[#allocation9 + $0x9c] sm:$0xff]
          %v581 = vld [vmem:[#allocation9 + $0xa4] sm:$0xf]
          %v582 = vld [vmem:[#allocation9 + $0xa8] sm:$0xff]
          %v583 = vld [vmem:[#allocation9 + $0xb0] sm:$0xf]
          %v584 = vld [vmem:[#allocation9 + $0xb4] sm:$0xff]
          %v585 = vld [vmem:[#allocation9 + $0xbc] sm:$0xf]
          %v586 = vld [vmem:[%s4] sm:$0x7]
          %v588 = vlaneseq
          %v589 = vshrl.u32 %v588, 7
          %v590 = vsub.s32 0, %v589
          %v591 = vrot.slane %v586, %v590
          %v592 = vlaneseq
          %v593 = vshrl.u32 %v592, 7
          %v594 = vsub.s32 1, %v593
          %v595 = vrot.slane %v586, %v594
          %v596 = vlaneseq
          %v597 = vshrl.u32 %v596, 7
          %v598 = vsub.s32 2, %v597
          %v599 = vrot.slane %v586, %v598
          %v635 = vunpack.c.l.b16 %v554
          %v636 = vunpack.c.h.b16 %v554
          %v637 = vunpack.c.l.b16 %v555
          %v638 = vunpack.c.l.b16 %v556
          %v639 = vunpack.c.h.b16 %v556
          %v640 = vunpack.c.l.b16 %v557
          %v641 = vunpack.c.l.b16 %v558
          %v642 = vunpack.c.h.b16 %v558
          %v643 = vunpack.c.l.b16 %v559
          %v644 = vunpack.c.l.b16 %v560
          %v645 = vunpack.c.h.b16 %v560
          %v646 = vunpack.c.l.b16 %v561
          %v647 = vunpack.c.l.b16 %v562
          %v648 = vunpack.c.h.b16 %v562
          %v649 = vunpack.c.l.b16 %v563
          %v650 = vunpack.c.l.b16 %v564
          %v651 = vunpack.c.h.b16 %v564
          %v652 = vunpack.c.l.b16 %v565
          %v653 = vunpack.c.l.b16 %v566
          %v654 = vunpack.c.h.b16 %v566
          %v655 = vunpack.c.l.b16 %v567
          %v656 = vunpack.c.l.b16 %v568
          %v657 = vunpack.c.h.b16 %v568
          %v658 = vunpack.c.l.b16 %v569
          %v659 = vunpack.c.l.b16 %v570
          %v660 = vunpack.c.h.b16 %v570
          %v661 = vunpack.c.l.b16 %v571
          %v662 = vunpack.c.l.b16 %v572
          %v663 = vunpack.c.h.b16 %v572
          %v664 = vunpack.c.l.b16 %v573
          %v665 = vunpack.c.l.b16 %v574
          %v666 = vunpack.c.h.b16 %v574
          %v667 = vunpack.c.l.b16 %v575
          %v668 = vunpack.c.l.b16 %v576
          %v669 = vunpack.c.h.b16 %v576
          %v670 = vunpack.c.l.b16 %v577
          %v671 = vunpack.c.l.b16 %v578
          %v672 = vunpack.c.h.b16 %v578
          %v673 = vunpack.c.l.b16 %v579
          %v674 = vunpack.c.l.b16 %v580
          %v675 = vunpack.c.h.b16 %v580
          %v676 = vunpack.c.l.b16 %v581
          %v677 = vunpack.c.l.b16 %v582
          %v678 = vunpack.c.h.b16 %v582
          %v679 = vunpack.c.l.b16 %v583
          %v680 = vunpack.c.l.b16 %v584
          %v681 = vunpack.c.h.b16 %v584
          %v682 = vunpack.c.l.b16 %v585
          %v683 = vpack.c.b16 %v638, %v635
          %v684 = vpack.c.b16 %v639, %v636
          %v685 = vpack.c.b16 %v640, %v637
          %v686 = vpack.c.b16 %v644, %v641
          %v687 = vpack.c.b16 %v645, %v642
          %v688 = vpack.c.b16 %v646, %v643
          %v689 = vpack.c.b16 %v650, %v647
          %v690 = vpack.c.b16 %v651, %v648
          %v691 = vpack.c.b16 %v652, %v649
          %v692 = vpack.c.b16 %v656, %v653
          %v693 = vpack.c.b16 %v657, %v654
          %v694 = vpack.c.b16 %v658, %v655
          %v695 = vpack.c.b16 %v662, %v659
          %v696 = vpack.c.b16 %v663, %v660
          %v697 = vpack.c.b16 %v664, %v661
          %v698 = vpack.c.b16 %v668, %v665
          %v699 = vpack.c.b16 %v669, %v666
          %v700 = vpack.c.b16 %v670, %v667
          %v701 = vpack.c.b16 %v674, %v671
          %v702 = vpack.c.b16 %v675, %v672
          %v703 = vpack.c.b16 %v676, %v673
          %v704 = vpack.c.b16 %v680, %v677
          %v705 = vpack.c.b16 %v681, %v678
          %v706 = vpack.c.b16 %v682, %v679
          %731 = vmatprep.subr.bf16.mxu0 %v684
          %732 = vmatpush1.bf16.msra.mxu0 %v683
          %733 = vmatprep.subr.bf16.mxu0 %v687
          %734 = vmatpush1.bf16.msra.mxu0 %v686
          %735 = vmatprep.subr.bf16.mxu0 %v690
          %736 = vmatpush1.bf16.msra.mxu0 %v689
          %737 = vmatprep.subr.bf16.mxu0 %v693
          %738 = vmatpush1.bf16.msra.mxu0 %v692
          %739 = vmatprep.subr.bf16.mxu0 %v696
          %740 = vmatpush1.bf16.msra.mxu0 %v695
          %741 = vmatprep.subr.bf16.mxu0 %v699
          %742 = vmatpush1.bf16.msra.mxu0 %v698
          %743 = vmatprep.subr.bf16.mxu0 %v702
          %744 = vmatpush1.bf16.msra.mxu0 %v701
          %745 = vmatprep.subr.bf16.mxu0 %v705
          %746 = vmatpush1.bf16.msra.mxu0 %v704
          %747 = vmatprep.subr.bf16.mxu0 0
          %748 = vmatpush1.bf16.msra.mxu0 0
          %749 = vmatprep.subr.bf16.mxu0 0
          %750 = vmatpush1.bf16.msra.mxu0 0
          %751 = vmatprep.subr.bf16.mxu0 0
          %752 = vmatpush1.bf16.msra.mxu0 0
          %753 = vmatprep.subr.bf16.mxu0 0
          %754 = vmatpush1.bf16.msra.mxu0 0
          %755 = vmatprep.subr.bf16.mxu0 0
          %756 = vmatpush1.bf16.msra.mxu0 0
          %757 = vmatprep.subr.bf16.mxu0 0
          %758 = vmatpush1.bf16.msra.mxu0 0
          %759 = vmatprep.subr.bf16.mxu0 0
          %760 = vmatpush1.bf16.msra.mxu0 0
          %761 = vmatprep.subr.bf16.mxu0 0
          %762 = vmatpush1.bf16.msra.mxu0 0
          %763 = vmatprep.mubr.bf16.mxu0 0
          %764 = vmatmul.mubr.bf16.gmra.mrb[0].mxu0 %v553
          %v765 = vpop.f32.mrb[0].mxu0
          %v766 = vadd.f32 %v591, %v765
          %v767 = vpop.f32.mrb[0].mxu0
          %v768 = vadd.f32 %v595, %v767
          %v769 = vpop.f32.mrb[0].mxu0
          %v770 = vpop.f32.mrb[0].mxu0
          %771 = vdwg.mxu0
          %772 = vmatprep.subr.bf16.mxu0 0
          %773 = vmatpush1.bf16.msra.mxu0 %v685
          %774 = vmatprep.subr.bf16.mxu0 0
          %775 = vmatpush1.bf16.msra.mxu0 %v688
          %776 = vmatprep.subr.bf16.mxu0 0
          %777 = vmatpush1.bf16.msra.mxu0 %v691
          %778 = vmatprep.subr.bf16.mxu0 0
          %779 = vmatpush1.bf16.msra.mxu0 %v694
          %780 = vmatprep.subr.bf16.mxu0 0
          %781 = vmatpush1.bf16.msra.mxu0 %v697
          %782 = vmatprep.subr.bf16.mxu0 0
          %783 = vmatpush1.bf16.msra.mxu0 %v700
          %784 = vmatprep.subr.bf16.mxu0 0
          %785 = vmatpush1.bf16.msra.mxu0 %v703
          %786 = vmatprep.subr.bf16.mxu0 0
          %787 = vmatpush1.bf16.msra.mxu0 %v706
          %788 = vmatprep.subr.bf16.mxu0 0
          %789 = vmatpush1.bf16.msra.mxu0 0
          %790 = vmatprep.subr.bf16.mxu0 0
          %791 = vmatpush1.bf16.msra.mxu0 0
          %792 = vmatprep.subr.bf16.mxu0 0
          %793 = vmatpush1.bf16.msra.mxu0 0
          %794 = vmatprep.subr.bf16.mxu0 0
          %795 = vmatpush1.bf16.msra.mxu0 0
          %796 = vmatprep.subr.bf16.mxu0 0
          %797 = vmatpush1.bf16.msra.mxu0 0
          %798 = vmatprep.subr.bf16.mxu0 0
          %799 = vmatpush1.bf16.msra.mxu0 0
          %800 = vmatprep.subr.bf16.mxu0 0
          %801 = vmatpush1.bf16.msra.mxu0 0
          %802 = vmatprep.subr.bf16.mxu0 0
          %803 = vmatpush1.bf16.msra.mxu0 0
          %804 = vmatprep.mubr.bf16.mxu0 0
          %805 = vmatmul.mubr.bf16.gmra.mrb[0].mxu0 %v553
          %v806 = vpop.f32.mrb[0].mxu0
          %v807 = vadd.f32 %v599, %v806
          %v808 = vpop.f32.mrb[0].mxu0
          %v809 = vpop.f32.mrb[0].mxu0
          %v810 = vpop.f32.mrb[0].mxu0
          %811 = vdwg.mxu0
          %v812 = vadd.f32 %v541, %v766
          %v813 = vxor.u32 %v812, 2147483648
          %v814 = vmul.f32 %v813, 1.442695
          %v815 = vpow.pop %v814
          %v816 = vadd.f32 %v815, 1.0
          %v817 = vrcp.pop %v816
          %v818 = vmul.f32 1.0, %v817
          %v819 = vadd.f32 %v542, %v768
          %v820 = vxor.u32 %v819, 2147483648
          %v821 = vmul.f32 %v820, 1.442695
          %v822 = vpow.pop %v821
          %v823 = vadd.f32 %v822, 1.0
          %v824 = vrcp.pop %v823
          %v825 = vmul.f32 1.0, %v824
          %v826 = vmul.f32 %v818, %v807
          %v827 = vadd.f32 %v543, %v826
          %v828 = vtanh.pop %v827
          %v829 = vsub.f32 1.0, %v825
          %v830 = vmul.f32 %v829, %v828
          %v831 = vmul.f32 %v825, %v544
          %v832 = vadd.f32 %v830, %v831
          %833 = vst [vmem:[%s528] sm:$0xff] %v832
          %v834 = vpack.c.bf16 %v832, %v832
          %v837 = vunpack.c.l.s4 1966171168
          %v838 = vunpack.c.0.s8 %v837
          %v839 = vlaneseq
          %v840 = vshrl.u32 %v839, 7
          %v841 = vsub.s32 %v838, %v840
          %v842 = vrot.slane %v834, %v841
          %v843 = vcombine.high %v842, %v842
          %v845 = vunpack.c.l.s4 1966171168
          %v846 = vunpack.c.0.s8 %v845
          %v847 = vlaneseq
          %v848 = vshrl.u32 %v847, 7
          %v849 = vsub.s32 %v846, %v848
          %v850 = vrot.slane %v842, %v849
          %v852 = vunpack.c.l.s4 1966171168
          %v853 = vunpack.c.0.s8 %v852
          %v854 = vlaneseq
          %v855 = vshrl.u32 %v854, 7
          %v856 = vsub.s32 %v853, %v855
          %v857 = vrot.slane %v843, %v856
          %v858 = vcombine.high %v850, %v850
          %v859 = vcombine.high %v857, %v857
          %v860 = vunpack.i.l.s16 %v850
          %v861 = vunpack.i.h.s16 %v850
          %v862 = vunpack.i.l.s16 %v857
          %v863 = vunpack.i.h.s16 %v857
          %v864 = vunpack.i.l.s16 %v858
          %v865 = vunpack.i.h.s16 %v858
          %v866 = vunpack.i.l.s16 %v859
          %v867 = vunpack.i.h.s16 %v859
          %v868 = vpack.i.b16 %v860, %v860
          %v869 = vlaneseq
          %v870 = vshrl.u32 %v869, 7
          %v871 = vsub.s32 0, %v870
          %v872 = vrot.slane %v868, %v871
          %874 = vmatprep.subr.bf16.mxu0 0
          %875 = vmatpush1.bf16.xpose.msra.mxu0 %v545
          %876 = vmatprep.subr.bf16.mxu0 0
          %877 = vmatpush1.bf16.xpose.msra.mxu0 0
          %878 = vmatprep.subr.bf16.mxu0 0
          %879 = vmatpush1.bf16.xpose.msra.mxu0 0
          %880 = vmatprep.subr.bf16.mxu0 0
          %881 = vmatpush1.bf16.xpose.msra.mxu0 0
          %882 = vmatprep.subr.bf16.mxu0 0
          %883 = vmatpush1.bf16.xpose.msra.mxu0 0
          %884 = vmatprep.subr.bf16.mxu0 0
          %885 = vmatpush1.bf16.xpose.msra.mxu0 0
          %886 = vmatprep.subr.bf16.mxu0 0
          %887 = vmatpush1.bf16.xpose.msra.mxu0 0
          %888 = vmatprep.subr.bf16.mxu0 0
          %889 = vmatpush1.bf16.xpose.msra.mxu0 0
          %890 = vmatprep.subr.bf16.mxu0 0
          %891 = vmatpush1.bf16.xpose.msra.mxu0 0
          %892 = vmatprep.subr.bf16.mxu0 0
          %893 = vmatpush1.bf16.xpose.msra.mxu0 0
          %894 = vmatprep.subr.bf16.mxu0 0
          %895 = vmatpush1.bf16.xpose.msra.mxu0 0
          %896 = vmatprep.subr.bf16.mxu0 0
          %897 = vmatpush1.bf16.xpose.msra.mxu0 0
          %898 = vmatprep.subr.bf16.mxu0 0
          %899 = vmatpush1.bf16.xpose.msra.mxu0 0
          %900 = vmatprep.subr.bf16.mxu0 0
          %901 = vmatpush1.bf16.xpose.msra.mxu0 0
          %902 = vmatprep.subr.bf16.mxu0 0
          %903 = vmatpush1.bf16.xpose.msra.mxu0 0
          %904 = vmatprep.subr.bf16.mxu0 0
          %905 = vmatpush1.bf16.xpose.msra.mxu0 0
          %906 = vmatprep.mubr.bf16.mxu0 0
          %907 = vmatmul.mubr.bf16.gmra.mrb[0].mxu0 %v872
          %v908 = vpop.f32.mrb[0].mxu0
          %v909 = vadd.f32 0.0, %v908
          %v910 = vpop.f32.mrb[0].mxu0
          %v911 = vpop.f32.mrb[0].mxu0
          %v912 = vpop.f32.mrb[0].mxu0
          %913 = vdwg.mxu0
          %v914 = vpack.i.b16 %v861, %v861
          %v915 = vlaneseq
          %v916 = vshrl.u32 %v915, 7
          %v917 = vsub.s32 0, %v916
          %v918 = vrot.slane %v914, %v917
          %920 = vmatprep.subr.bf16.mxu0 0
          %921 = vmatpush1.bf16.xpose.msra.mxu0 %v546
          %922 = vmatprep.subr.bf16.mxu0 0
          %923 = vmatpush1.bf16.xpose.msra.mxu0 0
          %924 = vmatprep.subr.bf16.mxu0 0
          %925 = vmatpush1.bf16.xpose.msra.mxu0 0
          %926 = vmatprep.subr.bf16.mxu0 0
          %927 = vmatpush1.bf16.xpose.msra.mxu0 0
          %928 = vmatprep.subr.bf16.mxu0 0
          %929 = vmatpush1.bf16.xpose.msra.mxu0 0
          %930 = vmatprep.subr.bf16.mxu0 0
          %931 = vmatpush1.bf16.xpose.msra.mxu0 0
          %932 = vmatprep.subr.bf16.mxu0 0
          %933 = vmatpush1.bf16.xpose.msra.mxu0 0
          %934 = vmatprep.subr.bf16.mxu0 0
          %935 = vmatpush1.bf16.xpose.msra.mxu0 0
          %936 = vmatprep.subr.bf16.mxu0 0
          %937 = vmatpush1.bf16.xpose.msra.mxu0 0
          %938 = vmatprep.subr.bf16.mxu0 0
          %939 = vmatpush1.bf16.xpose.msra.mxu0 0
          %940 = vmatprep.subr.bf16.mxu0 0
          %941 = vmatpush1.bf16.xpose.msra.mxu0 0
          %942 = vmatprep.subr.bf16.mxu0 0
          %943 = vmatpush1.bf16.xpose.msra.mxu0 0
          %944 = vmatprep.subr.bf16.mxu0 0
          %945 = vmatpush1.bf16.xpose.msra.mxu0 0
          %946 = vmatprep.subr.bf16.mxu0 0
          %947 = vmatpush1.bf16.xpose.msra.mxu0 0
          %948 = vmatprep.subr.bf16.mxu0 0
          %949 = vmatpush1.bf16.xpose.msra.mxu0 0
          %950 = vmatprep.subr.bf16.mxu0 0
          %951 = vmatpush1.bf16.xpose.msra.mxu0 0
          %952 = vmatprep.mubr.bf16.mxu0 0
          %953 = vmatmul.mubr.bf16.gmra.mrb[0].mxu0 %v918
          %v954 = vpop.f32.mrb[0].mxu0
          %v955 = vadd.f32 0.0, %v954
          %v956 = vpop.f32.mrb[0].mxu0
          %v957 = vpop.f32.mrb[0].mxu0
          %v958 = vpop.f32.mrb[0].mxu0
          %959 = vdwg.mxu0
          %v960 = vpack.i.b16 %v862, %v862
          %v961 = vlaneseq
          %v962 = vshrl.u32 %v961, 7
          %v963 = vsub.s32 0, %v962
          %v964 = vrot.slane %v960, %v963
          %966 = vmatprep.subr.bf16.mxu0 0
          %967 = vmatpush1.bf16.xpose.msra.mxu0 %v547
          %968 = vmatprep.subr.bf16.mxu0 0
          %969 = vmatpush1.bf16.xpose.msra.mxu0 0
          %970 = vmatprep.subr.bf16.mxu0 0
          %971 = vmatpush1.bf16.xpose.msra.mxu0 0
          %972 = vmatprep.subr.bf16.mxu0 0
          %973 = vmatpush1.bf16.xpose.msra.mxu0 0
          %974 = vmatprep.subr.bf16.mxu0 0
          %975 = vmatpush1.bf16.xpose.msra.mxu0 0
          %976 = vmatprep.subr.bf16.mxu0 0
          %977 = vmatpush1.bf16.xpose.msra.mxu0 0
          %978 = vmatprep.subr.bf16.mxu0 0
          %979 = vmatpush1.bf16.xpose.msra.mxu0 0
          %980 = vmatprep.subr.bf16.mxu0 0
          %981 = vmatpush1.bf16.xpose.msra.mxu0 0
          %982 = vmatprep.subr.bf16.mxu0 0
          %983 = vmatpush1.bf16.xpose.msra.mxu0 0
          %984 = vmatprep.subr.bf16.mxu0 0
          %985 = vmatpush1.bf16.xpose.msra.mxu0 0
          %986 = vmatprep.subr.bf16.mxu0 0
          %987 = vmatpush1.bf16.xpose.msra.mxu0 0
          %988 = vmatprep.subr.bf16.mxu0 0
          %989 = vmatpush1.bf16.xpose.msra.mxu0 0
          %990 = vmatprep.subr.bf16.mxu0 0
          %991 = vmatpush1.bf16.xpose.msra.mxu0 0
          %992 = vmatprep.subr.bf16.mxu0 0
          %993 = vmatpush1.bf16.xpose.msra.mxu0 0
          %994 = vmatprep.subr.bf16.mxu0 0
          %995 = vmatpush1.bf16.xpose.msra.mxu0 0
          %996 = vmatprep.subr.bf16.mxu0 0
          %997 = vmatpush1.bf16.xpose.msra.mxu0 0
          %998 = vmatprep.mubr.bf16.mxu0 0
          %999 = vmatmul.mubr.bf16.gmra.mrb[0].mxu0 %v964
          %v1000 = vpop.f32.mrb[0].mxu0
          %v1001 = vadd.f32 0.0, %v1000
          %v1002 = vpop.f32.mrb[0].mxu0
          %v1003 = vpop.f32.mrb[0].mxu0
          %v1004 = vpop.f32.mrb[0].mxu0
          %1005 = vdwg.mxu0
          %v1006 = vpack.i.b16 %v863, %v863
          %v1007 = vlaneseq
          %v1008 = vshrl.u32 %v1007, 7
          %v1009 = vsub.s32 0, %v1008
          %v1010 = vrot.slane %v1006, %v1009
          %1012 = vmatprep.subr.bf16.mxu0 0
          %1013 = vmatpush1.bf16.xpose.msra.mxu0 %v548
          %1014 = vmatprep.subr.bf16.mxu0 0
          %1015 = vmatpush1.bf16.xpose.msra.mxu0 0
          %1016 = vmatprep.subr.bf16.mxu0 0
          %1017 = vmatpush1.bf16.xpose.msra.mxu0 0
          %1018 = vmatprep.subr.bf16.mxu0 0
          %1019 = vmatpush1.bf16.xpose.msra.mxu0 0
          %1020 = vmatprep.subr.bf16.mxu0 0
          %1021 = vmatpush1.bf16.xpose.msra.mxu0 0
          %1022 = vmatprep.subr.bf16.mxu0 0
          %1023 = vmatpush1.bf16.xpose.msra.mxu0 0
          %1024 = vmatprep.subr.bf16.mxu0 0
          %1025 = vmatpush1.bf16.xpose.msra.mxu0 0
          %1026 = vmatprep.subr.bf16.mxu0 0
          %1027 = vmatpush1.bf16.xpose.msra.mxu0 0
          %1028 = vmatprep.subr.bf16.mxu0 0
          %1029 = vmatpush1.bf16.xpose.msra.mxu0 0
          %1030 = vmatprep.subr.bf16.mxu0 0
          %1031 = vmatpush1.bf16.xpose.msra.mxu0 0
          %1032 = vmatprep.subr.bf16.mxu0 0
          %1033 = vmatpush1.bf16.xpose.msra.mxu0 0
          %1034 = vmatprep.subr.bf16.mxu0 0
          %1035 = vmatpush1.bf16.xpose.msra.mxu0 0
          %1036 = vmatprep.subr.bf16.mxu0 0
          %1037 = vmatpush1.bf16.xpose.msra.mxu0 0
          %1038 = vmatprep.subr.bf16.mxu0 0
          %1039 = vmatpush1.bf16.xpose.msra.mxu0 0
          %1040 = vmatprep.subr.bf16.mxu0 0
          %1041 = vmatpush1.bf16.xpose.msra.mxu0 0
          %1042 = vmatprep.subr.bf16.mxu0 0
          %1043 = vmatpush1.bf16.xpose.msra.mxu0 0
          %1044 = vmatprep.mubr.bf16.mxu0 0
          %1045 = vmatmul.mubr.bf16.gmra.mrb[0].mxu0 %v1010
          %v1046 = vpop.f32.mrb[0].mxu0
          %v1047 = vadd.f32 0.0, %v1046
          %v1048 = vpop.f32.mrb[0].mxu0
          %v1049 = vpop.f32.mrb[0].mxu0
          %v1050 = vpop.f32.mrb[0].mxu0
          %1051 = vdwg.mxu0
          %v1052 = vpack.i.b16 %v864, %v864
          %v1053 = vlaneseq
          %v1054 = vshrl.u32 %v1053, 7
          %v1055 = vsub.s32 0, %v1054
          %v1056 = vrot.slane %v1052, %v1055
          %1058 = vmatprep.subr.bf16.mxu0 0
          %1059 = vmatpush1.bf16.xpose.msra.mxu0 %v549
          %1060 = vmatprep.subr.bf16.mxu0 0
          %1061 = vmatpush1.bf16.xpose.msra.mxu0 0
          %1062 = vmatprep.subr.bf16.mxu0 0
          %1063 = vmatpush1.bf16.xpose.msra.mxu0 0
          %1064 = vmatprep.subr.bf16.mxu0 0
          %1065 = vmatpush1.bf16.xpose.msra.mxu0 0
          %1066 = vmatprep.subr.bf16.mxu0 0
          %1067 = vmatpush1.bf16.xpose.msra.mxu0 0
          %1068 = vmatprep.subr.bf16.mxu0 0
          %1069 = vmatpush1.bf16.xpose.msra.mxu0 0
          %1070 = vmatprep.subr.bf16.mxu0 0
          %1071 = vmatpush1.bf16.xpose.msra.mxu0 0
          %1072 = vmatprep.subr.bf16.mxu0 0
          %1073 = vmatpush1.bf16.xpose.msra.mxu0 0
          %1074 = vmatprep.subr.bf16.mxu0 0
          %1075 = vmatpush1.bf16.xpose.msra.mxu0 0
          %1076 = vmatprep.subr.bf16.mxu0 0
          %1077 = vmatpush1.bf16.xpose.msra.mxu0 0
          %1078 = vmatprep.subr.bf16.mxu0 0
          %1079 = vmatpush1.bf16.xpose.msra.mxu0 0
          %1080 = vmatprep.subr.bf16.mxu0 0
          %1081 = vmatpush1.bf16.xpose.msra.mxu0 0
          %1082 = vmatprep.subr.bf16.mxu0 0
          %1083 = vmatpush1.bf16.xpose.msra.mxu0 0
          %1084 = vmatprep.subr.bf16.mxu0 0
          %1085 = vmatpush1.bf16.xpose.msra.mxu0 0
          %1086 = vmatprep.subr.bf16.mxu0 0
          %1087 = vmatpush1.bf16.xpose.msra.mxu0 0
          %1088 = vmatprep.subr.bf16.mxu0 0
          %1089 = vmatpush1.bf16.xpose.msra.mxu0 0
          %1090 = vmatprep.mubr.bf16.mxu0 0
          %1091 = vmatmul.mubr.bf16.gmra.mrb[0].mxu0 %v1056
          %v1092 = vpop.f32.mrb[0].mxu0
          %v1093 = vadd.f32 0.0, %v1092
          %v1094 = vpop.f32.mrb[0].mxu0
          %v1095 = vpop.f32.mrb[0].mxu0
          %v1096 = vpop.f32.mrb[0].mxu0
          %1097 = vdwg.mxu0
          %v1098 = vpack.i.b16 %v865, %v865
          %v1099 = vlaneseq
          %v1100 = vshrl.u32 %v1099, 7
          %v1101 = vsub.s32 0, %v1100
          %v1102 = vrot.slane %v1098, %v1101
          %1104 = vmatprep.subr.bf16.mxu0 0
          %1105 = vmatpush1.bf16.xpose.msra.mxu0 %v550
          %1106 = vmatprep.subr.bf16.mxu0 0
          %1107 = vmatpush1.bf16.xpose.msra.mxu0 0
          %1108 = vmatprep.subr.bf16.mxu0 0
          %1109 = vmatpush1.bf16.xpose.msra.mxu0 0
          %1110 = vmatprep.subr.bf16.mxu0 0
          %1111 = vmatpush1.bf16.xpose.msra.mxu0 0
          %1112 = vmatprep.subr.bf16.mxu0 0
          %1113 = vmatpush1.bf16.xpose.msra.mxu0 0
          %1114 = vmatprep.subr.bf16.mxu0 0
          %1115 = vmatpush1.bf16.xpose.msra.mxu0 0
          %1116 = vmatprep.subr.bf16.mxu0 0
          %1117 = vmatpush1.bf16.xpose.msra.mxu0 0
          %1118 = vmatprep.subr.bf16.mxu0 0
          %1119 = vmatpush1.bf16.xpose.msra.mxu0 0
          %1120 = vmatprep.subr.bf16.mxu0 0
          %1121 = vmatpush1.bf16.xpose.msra.mxu0 0
          %1122 = vmatprep.subr.bf16.mxu0 0
          %1123 = vmatpush1.bf16.xpose.msra.mxu0 0
          %1124 = vmatprep.subr.bf16.mxu0 0
          %1125 = vmatpush1.bf16.xpose.msra.mxu0 0
          %1126 = vmatprep.subr.bf16.mxu0 0
          %1127 = vmatpush1.bf16.xpose.msra.mxu0 0
          %1128 = vmatprep.subr.bf16.mxu0 0
          %1129 = vmatpush1.bf16.xpose.msra.mxu0 0
          %1130 = vmatprep.subr.bf16.mxu0 0
          %1131 = vmatpush1.bf16.xpose.msra.mxu0 0
          %1132 = vmatprep.subr.bf16.mxu0 0
          %1133 = vmatpush1.bf16.xpose.msra.mxu0 0
          %1134 = vmatprep.subr.bf16.mxu0 0
          %1135 = vmatpush1.bf16.xpose.msra.mxu0 0
          %1136 = vmatprep.mubr.bf16.mxu0 0
          %1137 = vmatmul.mubr.bf16.gmra.mrb[0].mxu0 %v1102
          %v1138 = vpop.f32.mrb[0].mxu0
          %v1139 = vadd.f32 0.0, %v1138
          %v1140 = vpop.f32.mrb[0].mxu0
          %v1141 = vpop.f32.mrb[0].mxu0
          %v1142 = vpop.f32.mrb[0].mxu0
          %1143 = vdwg.mxu0
          %v1144 = vpack.i.b16 %v866, %v866
          %v1145 = vlaneseq
          %v1146 = vshrl.u32 %v1145, 7
          %v1147 = vsub.s32 0, %v1146
          %v1148 = vrot.slane %v1144, %v1147
          %1150 = vmatprep.subr.bf16.mxu0 0
          %1151 = vmatpush1.bf16.xpose.msra.mxu0 %v551
          %1152 = vmatprep.subr.bf16.mxu0 0
          %1153 = vmatpush1.bf16.xpose.msra.mxu0 0
          %1154 = vmatprep.subr.bf16.mxu0 0
          %1155 = vmatpush1.bf16.xpose.msra.mxu0 0
          %1156 = vmatprep.subr.bf16.mxu0 0
          %1157 = vmatpush1.bf16.xpose.msra.mxu0 0
          %1158 = vmatprep.subr.bf16.mxu0 0
          %1159 = vmatpush1.bf16.xpose.msra.mxu0 0
          %1160 = vmatprep.subr.bf16.mxu0 0
          %1161 = vmatpush1.bf16.xpose.msra.mxu0 0
          %1162 = vmatprep.subr.bf16.mxu0 0
          %1163 = vmatpush1.bf16.xpose.msra.mxu0 0
          %1164 = vmatprep.subr.bf16.mxu0 0
          %1165 = vmatpush1.bf16.xpose.msra.mxu0 0
          %1166 = vmatprep.subr.bf16.mxu0 0
          %1167 = vmatpush1.bf16.xpose.msra.mxu0 0
          %1168 = vmatprep.subr.bf16.mxu0 0
          %1169 = vmatpush1.bf16.xpose.msra.mxu0 0
          %1170 = vmatprep.subr.bf16.mxu0 0
          %1171 = vmatpush1.bf16.xpose.msra.mxu0 0
          %1172 = vmatprep.subr.bf16.mxu0 0
          %1173 = vmatpush1.bf16.xpose.msra.mxu0 0
          %1174 = vmatprep.subr.bf16.mxu0 0
          %1175 = vmatpush1.bf16.xpose.msra.mxu0 0
          %1176 = vmatprep.subr.bf16.mxu0 0
          %1177 = vmatpush1.bf16.xpose.msra.mxu0 0
          %1178 = vmatprep.subr.bf16.mxu0 0
          %1179 = vmatpush1.bf16.xpose.msra.mxu0 0
          %1180 = vmatprep.subr.bf16.mxu0 0
          %1181 = vmatpush1.bf16.xpose.msra.mxu0 0
          %1182 = vmatprep.mubr.bf16.mxu0 0
          %1183 = vmatmul.mubr.bf16.gmra.mrb[0].mxu0 %v1148
          %v1184 = vpop.f32.mrb[0].mxu0
          %v1185 = vadd.f32 0.0, %v1184
          %v1186 = vpop.f32.mrb[0].mxu0
          %v1187 = vpop.f32.mrb[0].mxu0
          %v1188 = vpop.f32.mrb[0].mxu0
          %1189 = vdwg.mxu0
          %v1190 = vpack.i.b16 %v867, %v867
          %v1191 = vlaneseq
          %v1192 = vshrl.u32 %v1191, 7
          %v1193 = vsub.s32 0, %v1192
          %v1194 = vrot.slane %v1190, %v1193
          %1196 = vmatprep.subr.bf16.mxu0 0
          %1197 = vmatpush1.bf16.xpose.msra.mxu0 %v552
          %1198 = vmatprep.subr.bf16.mxu0 0
          %1199 = vmatpush1.bf16.xpose.msra.mxu0 0
          %1200 = vmatprep.subr.bf16.mxu0 0
          %1201 = vmatpush1.bf16.xpose.msra.mxu0 0
          %1202 = vmatprep.subr.bf16.mxu0 0
          %1203 = vmatpush1.bf16.xpose.msra.mxu0 0
          %1204 = vmatprep.subr.bf16.mxu0 0
          %1205 = vmatpush1.bf16.xpose.msra.mxu0 0
          %1206 = vmatprep.subr.bf16.mxu0 0
          %1207 = vmatpush1.bf16.xpose.msra.mxu0 0
          %1208 = vmatprep.subr.bf16.mxu0 0
          %1209 = vmatpush1.bf16.xpose.msra.mxu0 0
          %1210 = vmatprep.subr.bf16.mxu0 0
          %1211 = vmatpush1.bf16.xpose.msra.mxu0 0
          %1212 = vmatprep.subr.bf16.mxu0 0
          %1213 = vmatpush1.bf16.xpose.msra.mxu0 0
          %1214 = vmatprep.subr.bf16.mxu0 0
          %1215 = vmatpush1.bf16.xpose.msra.mxu0 0
          %1216 = vmatprep.subr.bf16.mxu0 0
          %1217 = vmatpush1.bf16.xpose.msra.mxu0 0
          %1218 = vmatprep.subr.bf16.mxu0 0
          %1219 = vmatpush1.bf16.xpose.msra.mxu0 0
          %1220 = vmatprep.subr.bf16.mxu0 0
          %1221 = vmatpush1.bf16.xpose.msra.mxu0 0
          %1222 = vmatprep.subr.bf16.mxu0 0
          %1223 = vmatpush1.bf16.xpose.msra.mxu0 0
          %1224 = vmatprep.subr.bf16.mxu0 0
          %1225 = vmatpush1.bf16.xpose.msra.mxu0 0
          %1226 = vmatprep.subr.bf16.mxu0 0
          %1227 = vmatpush1.bf16.xpose.msra.mxu0 0
          %1228 = vmatprep.mubr.bf16.mxu0 0
          %1229 = vmatmul.mubr.bf16.gmra.mrb[0].mxu0 %v1194
          %v1230 = vpop.f32.mrb[0].mxu0
          %v1231 = vadd.f32 0.0, %v1230
          %v1232 = vpop.f32.mrb[0].mxu0
          %v1233 = vpop.f32.mrb[0].mxu0
          %v1234 = vpop.f32.mrb[0].mxu0
          %1235 = vdwg.mxu0
          %vm1236 = vcmask 57344
          %v1237 = vsel %vm1236, %v909, -inf
          %1238 = vmax.xlane.f32.xlu0 %v1237
          %v1239 = vpop.xlane.xlu0 %1238
          %v1240 = vsel %vm1236, %v955, -inf
          %1241 = vmax.xlane.f32.xlu0 %v1240
          %v1242 = vpop.xlane.xlu0 %1241
          %v1243 = vsel %vm1236, %v1001, -inf
          %1244 = vmax.xlane.f32.xlu0 %v1243
          %v1245 = vpop.xlane.xlu0 %1244
          %v1246 = vsel %vm1236, %v1047, -inf
          %1247 = vmax.xlane.f32.xlu0 %v1246
          %v1248 = vpop.xlane.xlu0 %1247
          %v1249 = vsel %vm1236, %v1093, -inf
          %1250 = vmax.xlane.f32.xlu0 %v1249
          %v1251 = vpop.xlane.xlu0 %1250
          %v1252 = vsel %vm1236, %v1139, -inf
          %1253 = vmax.xlane.f32.xlu0 %v1252
          %v1254 = vpop.xlane.xlu0 %1253
          %v1255 = vsel %vm1236, %v1185, -inf
          %1256 = vmax.xlane.f32.xlu0 %v1255
          %v1257 = vpop.xlane.xlu0 %1256
          %v1258 = vsel %vm1236, %v1231, -inf
          %1259 = vmax.xlane.f32.xlu0 %v1258
          %v1260 = vpop.xlane.xlu0 %1259
          %v1261 = vsub.f32 %v909, %v1239
          %v1262 = vsub.f32 %v955, %v1242
          %v1263 = vsub.f32 %v1001, %v1245
          %v1264 = vsub.f32 %v1047, %v1248
          %v1265 = vsub.f32 %v1093, %v1251
          %v1266 = vsub.f32 %v1139, %v1254
          %v1267 = vsub.f32 %v1185, %v1257
          %v1268 = vsub.f32 %v1231, %v1260
          %v1269 = vmul.f32 %v1261, 1.442695
          %v1270 = vpow.pop %v1269
          %v1271 = vmul.f32 %v1262, 1.442695
          %v1272 = vpow.pop %v1271
          %v1273 = vmul.f32 %v1263, 1.442695
          %v1274 = vpow.pop %v1273
          %v1275 = vmul.f32 %v1264, 1.442695
          %v1276 = vpow.pop %v1275
          %v1277 = vmul.f32 %v1265, 1.442695
          %v1278 = vpow.pop %v1277
          %v1279 = vmul.f32 %v1266, 1.442695
          %v1280 = vpow.pop %v1279
          %v1281 = vmul.f32 %v1267, 1.442695
          %v1282 = vpow.pop %v1281
          %v1283 = vmul.f32 %v1268, 1.442695
          %v1284 = vpow.pop %v1283
          %v1285 = vsel %vm1236, %v1270, 0.0
          %1286 = vadd.xlane.f32.xlu0 %v1285
          %v1287 = vpop.xlane.xlu0 %1286
          %v1288 = vsel %vm1236, %v1272, 0.0
          %1289 = vadd.xlane.f32.xlu0 %v1288
          %v1290 = vpop.xlane.xlu0 %1289
          %v1291 = vsel %vm1236, %v1274, 0.0
          %1292 = vadd.xlane.f32.xlu0 %v1291
          %v1293 = vpop.xlane.xlu0 %1292
          %v1294 = vsel %vm1236, %v1276, 0.0
          %1295 = vadd.xlane.f32.xlu0 %v1294
          %v1296 = vpop.xlane.xlu0 %1295
          %v1297 = vsel %vm1236, %v1278, 0.0
          %1298 = vadd.xlane.f32.xlu0 %v1297
          %v1299 = vpop.xlane.xlu0 %1298
          %v1300 = vsel %vm1236, %v1280, 0.0
          %1301 = vadd.xlane.f32.xlu0 %v1300
          %v1302 = vpop.xlane.xlu0 %1301
          %v1303 = vsel %vm1236, %v1282, 0.0
          %1304 = vadd.xlane.f32.xlu0 %v1303
          %v1305 = vpop.xlane.xlu0 %1304
          %v1306 = vsel %vm1236, %v1284, 0.0
          %1307 = vadd.xlane.f32.xlu0 %v1306
          %v1308 = vpop.xlane.xlu0 %1307
          %v1309 = vrcp.pop %v1287
          %v1310 = vrcp.pop %v1290
          %v1311 = vrcp.pop %v1293
          %v1312 = vrcp.pop %v1296
          %v1313 = vrcp.pop %v1299
          %v1314 = vrcp.pop %v1302
          %v1315 = vrcp.pop %v1305
          %v1316 = vrcp.pop %v1308
          %v1317 = vmul.f32 %v1270, %v1309
          %v1318 = vmul.f32 %v1272, %v1310
          %v1319 = vmul.f32 %v1274, %v1311
          %v1320 = vmul.f32 %v1276, %v1312
          %v1321 = vmul.f32 %v1278, %v1313
          %v1322 = vmul.f32 %v1280, %v1314
          %v1323 = vmul.f32 %v1282, %v1315
          %v1324 = vmul.f32 %v1284, %v1316
          %v1325 = vpack.c.bf16 %v1317, %v1317
          %v1326 = vpack.c.bf16 %v1318, %v1318
          %v1327 = vpack.c.bf16 %v1319, %v1319
          %v1328 = vpack.c.bf16 %v1320, %v1320
          %v1329 = vpack.c.bf16 %v1321, %v1321
          %v1330 = vpack.c.bf16 %v1322, %v1322
          %v1331 = vpack.c.bf16 %v1323, %v1323
          %v1332 = vpack.c.bf16 %v1324, %v1324
          %vm1333 = vcmask 64512
          %v1335 = vsel %vm1333, %v1325, 0
          %vm1337 = vcmask 1043456
          %v1339 = vsel %vm1337, %v545, 0
          %1341 = vmatprep.subr.bf16.mxu0 0
          %1342 = vmatpush1.bf16.msra.mxu0 %v1339
          %1343 = vmatprep.subr.bf16.mxu0 0
          %1344 = vmatpush1.bf16.msra.mxu0 0
          %1345 = vmatprep.subr.bf16.mxu0 0
          %1346 = vmatpush1.bf16.msra.mxu0 0
          %1347 = vmatprep.subr.bf16.mxu0 0
          %1348 = vmatpush1.bf16.msra.mxu0 0
          %1349 = vmatprep.subr.bf16.mxu0 0
          %1350 = vmatpush1.bf16.msra.mxu0 0
          %1351 = vmatprep.subr.bf16.mxu0 0
          %1352 = vmatpush1.bf16.msra.mxu0 0
          %1353 = vmatprep.subr.bf16.mxu0 0
          %1354 = vmatpush1.bf16.msra.mxu0 0
          %1355 = vmatprep.subr.bf16.mxu0 0
          %1356 = vmatpush1.bf16.msra.mxu0 0
          %1357 = vmatprep.subr.bf16.mxu0 0
          %1358 = vmatpush1.bf16.msra.mxu0 0
          %1359 = vmatprep.subr.bf16.mxu0 0
          %1360 = vmatpush1.bf16.msra.mxu0 0
          %1361 = vmatprep.subr.bf16.mxu0 0
          %1362 = vmatpush1.bf16.msra.mxu0 0
          %1363 = vmatprep.subr.bf16.mxu0 0
          %1364 = vmatpush1.bf16.msra.mxu0 0
          %1365 = vmatprep.subr.bf16.mxu0 0
          %1366 = vmatpush1.bf16.msra.mxu0 0
          %1367 = vmatprep.subr.bf16.mxu0 0
          %1368 = vmatpush1.bf16.msra.mxu0 0
          %1369 = vmatprep.subr.bf16.mxu0 0
          %1370 = vmatpush1.bf16.msra.mxu0 0
          %1371 = vmatprep.subr.bf16.mxu0 0
          %1372 = vmatpush1.bf16.msra.mxu0 0
          %1373 = vmatprep.mubr.bf16.mxu0 0
          %1374 = vmatmul.mubr.bf16.gmra.mrb[0].mxu0 %v1335
          %v1375 = vpop.f32.mrb[0].mxu0
          %v1376 = vadd.f32 0.0, %v1375
          %v1377 = vpop.f32.mrb[0].mxu0
          %v1378 = vpop.f32.mrb[0].mxu0
          %v1379 = vpop.f32.mrb[0].mxu0
          %1380 = vdwg.mxu0
          %v1382 = vsel %vm1333, %v1326, 0
          %v1385 = vsel %vm1337, %v546, 0
          %1387 = vmatprep.subr.bf16.mxu0 0
          %1388 = vmatpush1.bf16.msra.mxu0 %v1385
          %1389 = vmatprep.subr.bf16.mxu0 0
          %1390 = vmatpush1.bf16.msra.mxu0 0
          %1391 = vmatprep.subr.bf16.mxu0 0
          %1392 = vmatpush1.bf16.msra.mxu0 0
          %1393 = vmatprep.subr.bf16.mxu0 0
          %1394 = vmatpush1.bf16.msra.mxu0 0
          %1395 = vmatprep.subr.bf16.mxu0 0
          %1396 = vmatpush1.bf16.msra.mxu0 0
          %1397 = vmatprep.subr.bf16.mxu0 0
          %1398 = vmatpush1.bf16.msra.mxu0 0
          %1399 = vmatprep.subr.bf16.mxu0 0
          %1400 = vmatpush1.bf16.msra.mxu0 0
          %1401 = vmatprep.subr.bf16.mxu0 0
          %1402 = vmatpush1.bf16.msra.mxu0 0
          %1403 = vmatprep.subr.bf16.mxu0 0
          %1404 = vmatpush1.bf16.msra.mxu0 0
          %1405 = vmatprep.subr.bf16.mxu0 0
          %1406 = vmatpush1.bf16.msra.mxu0 0
          %1407 = vmatprep.subr.bf16.mxu0 0
          %1408 = vmatpush1.bf16.msra.mxu0 0
          %1409 = vmatprep.subr.bf16.mxu0 0
          %1410 = vmatpush1.bf16.msra.mxu0 0
          %1411 = vmatprep.subr.bf16.mxu0 0
          %1412 = vmatpush1.bf16.msra.mxu0 0
          %1413 = vmatprep.subr.bf16.mxu0 0
          %1414 = vmatpush1.bf16.msra.mxu0 0
          %1415 = vmatprep.subr.bf16.mxu0 0
          %1416 = vmatpush1.bf16.msra.mxu0 0
          %1417 = vmatprep.subr.bf16.mxu0 0
          %1418 = vmatpush1.bf16.msra.mxu0 0
          %1419 = vmatprep.mubr.bf16.mxu0 0
          %1420 = vmatmul.mubr.bf16.gmra.mrb[0].mxu0 %v1382
          %v1421 = vpop.f32.mrb[0].mxu0
          %v1422 = vadd.f32 0.0, %v1421
          %v1423 = vpop.f32.mrb[0].mxu0
          %v1424 = vpop.f32.mrb[0].mxu0
          %v1425 = vpop.f32.mrb[0].mxu0
          %1426 = vdwg.mxu0
          %v1428 = vsel %vm1333, %v1327, 0
          %v1431 = vsel %vm1337, %v547, 0
          %1433 = vmatprep.subr.bf16.mxu0 0
          %1434 = vmatpush1.bf16.msra.mxu0 %v1431
          %1435 = vmatprep.subr.bf16.mxu0 0
          %1436 = vmatpush1.bf16.msra.mxu0 0
          %1437 = vmatprep.subr.bf16.mxu0 0
          %1438 = vmatpush1.bf16.msra.mxu0 0
          %1439 = vmatprep.subr.bf16.mxu0 0
          %1440 = vmatpush1.bf16.msra.mxu0 0
          %1441 = vmatprep.subr.bf16.mxu0 0
          %1442 = vmatpush1.bf16.msra.mxu0 0
          %1443 = vmatprep.subr.bf16.mxu0 0
          %1444 = vmatpush1.bf16.msra.mxu0 0
          %1445 = vmatprep.subr.bf16.mxu0 0
          %1446 = vmatpush1.bf16.msra.mxu0 0
          %1447 = vmatprep.subr.bf16.mxu0 0
          %1448 = vmatpush1.bf16.msra.mxu0 0
          %1449 = vmatprep.subr.bf16.mxu0 0
          %1450 = vmatpush1.bf16.msra.mxu0 0
          %1451 = vmatprep.subr.bf16.mxu0 0
          %1452 = vmatpush1.bf16.msra.mxu0 0
          %1453 = vmatprep.subr.bf16.mxu0 0
          %1454 = vmatpush1.bf16.msra.mxu0 0
          %1455 = vmatprep.subr.bf16.mxu0 0
          %1456 = vmatpush1.bf16.msra.mxu0 0
          %1457 = vmatprep.subr.bf16.mxu0 0
          %1458 = vmatpush1.bf16.msra.mxu0 0
          %1459 = vmatprep.subr.bf16.mxu0 0
          %1460 = vmatpush1.bf16.msra.mxu0 0
          %1461 = vmatprep.subr.bf16.mxu0 0
          %1462 = vmatpush1.bf16.msra.mxu0 0
          %1463 = vmatprep.subr.bf16.mxu0 0
          %1464 = vmatpush1.bf16.msra.mxu0 0
          %1465 = vmatprep.mubr.bf16.mxu0 0
          %1466 = vmatmul.mubr.bf16.gmra.mrb[0].mxu0 %v1428
          %v1467 = vpop.f32.mrb[0].mxu0
          %v1468 = vadd.f32 0.0, %v1467
          %v1469 = vpop.f32.mrb[0].mxu0
          %v1470 = vpop.f32.mrb[0].mxu0
          %v1471 = vpop.f32.mrb[0].mxu0
          %1472 = vdwg.mxu0
          %v1474 = vsel %vm1333, %v1328, 0
          %v1477 = vsel %vm1337, %v548, 0
          %1479 = vmatprep.subr.bf16.mxu0 0
          %1480 = vmatpush1.bf16.msra.mxu0 %v1477
          %1481 = vmatprep.subr.bf16.mxu0 0
          %1482 = vmatpush1.bf16.msra.mxu0 0
          %1483 = vmatprep.subr.bf16.mxu0 0
          %1484 = vmatpush1.bf16.msra.mxu0 0
          %1485 = vmatprep.subr.bf16.mxu0 0
          %1486 = vmatpush1.bf16.msra.mxu0 0
          %1487 = vmatprep.subr.bf16.mxu0 0
          %1488 = vmatpush1.bf16.msra.mxu0 0
          %1489 = vmatprep.subr.bf16.mxu0 0
          %1490 = vmatpush1.bf16.msra.mxu0 0
          %1491 = vmatprep.subr.bf16.mxu0 0
          %1492 = vmatpush1.bf16.msra.mxu0 0
          %1493 = vmatprep.subr.bf16.mxu0 0
          %1494 = vmatpush1.bf16.msra.mxu0 0
          %1495 = vmatprep.subr.bf16.mxu0 0
          %1496 = vmatpush1.bf16.msra.mxu0 0
          %1497 = vmatprep.subr.bf16.mxu0 0
          %1498 = vmatpush1.bf16.msra.mxu0 0
          %1499 = vmatprep.subr.bf16.mxu0 0
          %1500 = vmatpush1.bf16.msra.mxu0 0
          %1501 = vmatprep.subr.bf16.mxu0 0
          %1502 = vmatpush1.bf16.msra.mxu0 0
          %1503 = vmatprep.subr.bf16.mxu0 0
          %1504 = vmatpush1.bf16.msra.mxu0 0
          %1505 = vmatprep.subr.bf16.mxu0 0
          %1506 = vmatpush1.bf16.msra.mxu0 0
          %1507 = vmatprep.subr.bf16.mxu0 0
          %1508 = vmatpush1.bf16.msra.mxu0 0
          %1509 = vmatprep.subr.bf16.mxu0 0
          %1510 = vmatpush1.bf16.msra.mxu0 0
          %1511 = vmatprep.mubr.bf16.mxu0 0
          %1512 = vmatmul.mubr.bf16.gmra.mrb[0].mxu0 %v1474
          %v1513 = vpop.f32.mrb[0].mxu0
          %v1514 = vadd.f32 0.0, %v1513
          %v1515 = vpop.f32.mrb[0].mxu0
          %v1516 = vpop.f32.mrb[0].mxu0
          %v1517 = vpop.f32.mrb[0].mxu0
          %1518 = vdwg.mxu0
          %v1520 = vsel %vm1333, %v1329, 0
          %v1523 = vsel %vm1337, %v549, 0
          %1525 = vmatprep.subr.bf16.mxu0 0
          %1526 = vmatpush1.bf16.msra.mxu0 %v1523
          %1527 = vmatprep.subr.bf16.mxu0 0
          %1528 = vmatpush1.bf16.msra.mxu0 0
          %1529 = vmatprep.subr.bf16.mxu0 0
          %1530 = vmatpush1.bf16.msra.mxu0 0
          %1531 = vmatprep.subr.bf16.mxu0 0
          %1532 = vmatpush1.bf16.msra.mxu0 0
          %1533 = vmatprep.subr.bf16.mxu0 0
          %1534 = vmatpush1.bf16.msra.mxu0 0
          %1535 = vmatprep.subr.bf16.mxu0 0
          %1536 = vmatpush1.bf16.msra.mxu0 0
          %1537 = vmatprep.subr.bf16.mxu0 0
          %1538 = vmatpush1.bf16.msra.mxu0 0
          %1539 = vmatprep.subr.bf16.mxu0 0
          %1540 = vmatpush1.bf16.msra.mxu0 0
          %1541 = vmatprep.subr.bf16.mxu0 0
          %1542 = vmatpush1.bf16.msra.mxu0 0
          %1543 = vmatprep.subr.bf16.mxu0 0
          %1544 = vmatpush1.bf16.msra.mxu0 0
          %1545 = vmatprep.subr.bf16.mxu0 0
          %1546 = vmatpush1.bf16.msra.mxu0 0
          %1547 = vmatprep.subr.bf16.mxu0 0
          %1548 = vmatpush1.bf16.msra.mxu0 0
          %1549 = vmatprep.subr.bf16.mxu0 0
          %1550 = vmatpush1.bf16.msra.mxu0 0
          %1551 = vmatprep.subr.bf16.mxu0 0
          %1552 = vmatpush1.bf16.msra.mxu0 0
          %1553 = vmatprep.subr.bf16.mxu0 0
          %1554 = vmatpush1.bf16.msra.mxu0 0
          %1555 = vmatprep.subr.bf16.mxu0 0
          %1556 = vmatpush1.bf16.msra.mxu0 0
          %1557 = vmatprep.mubr.bf16.mxu0 0
          %1558 = vmatmul.mubr.bf16.gmra.mrb[0].mxu0 %v1520
          %v1559 = vpop.f32.mrb[0].mxu0
          %v1560 = vadd.f32 0.0, %v1559
          %v1561 = vpop.f32.mrb[0].mxu0
          %v1562 = vpop.f32.mrb[0].mxu0
          %v1563 = vpop.f32.mrb[0].mxu0
          %1564 = vdwg.mxu0
          %v1566 = vsel %vm1333, %v1330, 0
          %v1569 = vsel %vm1337, %v550, 0
          %1571 = vmatprep.subr.bf16.mxu0 0
          %1572 = vmatpush1.bf16.msra.mxu0 %v1569
          %1573 = vmatprep.subr.bf16.mxu0 0
          %1574 = vmatpush1.bf16.msra.mxu0 0
          %1575 = vmatprep.subr.bf16.mxu0 0
          %1576 = vmatpush1.bf16.msra.mxu0 0
          %1577 = vmatprep.subr.bf16.mxu0 0
          %1578 = vmatpush1.bf16.msra.mxu0 0
          %1579 = vmatprep.subr.bf16.mxu0 0
          %1580 = vmatpush1.bf16.msra.mxu0 0
          %1581 = vmatprep.subr.bf16.mxu0 0
          %1582 = vmatpush1.bf16.msra.mxu0 0
          %1583 = vmatprep.subr.bf16.mxu0 0
          %1584 = vmatpush1.bf16.msra.mxu0 0
          %1585 = vmatprep.subr.bf16.mxu0 0
          %1586 = vmatpush1.bf16.msra.mxu0 0
          %1587 = vmatprep.subr.bf16.mxu0 0
          %1588 = vmatpush1.bf16.msra.mxu0 0
          %1589 = vmatprep.subr.bf16.mxu0 0
          %1590 = vmatpush1.bf16.msra.mxu0 0
          %1591 = vmatprep.subr.bf16.mxu0 0
          %1592 = vmatpush1.bf16.msra.mxu0 0
          %1593 = vmatprep.subr.bf16.mxu0 0
          %1594 = vmatpush1.bf16.msra.mxu0 0
          %1595 = vmatprep.subr.bf16.mxu0 0
          %1596 = vmatpush1.bf16.msra.mxu0 0
          %1597 = vmatprep.subr.bf16.mxu0 0
          %1598 = vmatpush1.bf16.msra.mxu0 0
          %1599 = vmatprep.subr.bf16.mxu0 0
          %1600 = vmatpush1.bf16.msra.mxu0 0
          %1601 = vmatprep.subr.bf16.mxu0 0
          %1602 = vmatpush1.bf16.msra.mxu0 0
          %1603 = vmatprep.mubr.bf16.mxu0 0
          %1604 = vmatmul.mubr.bf16.gmra.mrb[0].mxu0 %v1566
          %v1605 = vpop.f32.mrb[0].mxu0
          %v1606 = vadd.f32 0.0, %v1605
          %v1607 = vpop.f32.mrb[0].mxu0
          %v1608 = vpop.f32.mrb[0].mxu0
          %v1609 = vpop.f32.mrb[0].mxu0
          %1610 = vdwg.mxu0
          %v1612 = vsel %vm1333, %v1331, 0
          %v1615 = vsel %vm1337, %v551, 0
          %1617 = vmatprep.subr.bf16.mxu0 0
          %1618 = vmatpush1.bf16.msra.mxu0 %v1615
          %1619 = vmatprep.subr.bf16.mxu0 0
          %1620 = vmatpush1.bf16.msra.mxu0 0
          %1621 = vmatprep.subr.bf16.mxu0 0
          %1622 = vmatpush1.bf16.msra.mxu0 0
          %1623 = vmatprep.subr.bf16.mxu0 0
          %1624 = vmatpush1.bf16.msra.mxu0 0
          %1625 = vmatprep.subr.bf16.mxu0 0
          %1626 = vmatpush1.bf16.msra.mxu0 0
          %1627 = vmatprep.subr.bf16.mxu0 0
          %1628 = vmatpush1.bf16.msra.mxu0 0
          %1629 = vmatprep.subr.bf16.mxu0 0
          %1630 = vmatpush1.bf16.msra.mxu0 0
          %1631 = vmatprep.subr.bf16.mxu0 0
          %1632 = vmatpush1.bf16.msra.mxu0 0
          %1633 = vmatprep.subr.bf16.mxu0 0
          %1634 = vmatpush1.bf16.msra.mxu0 0
          %1635 = vmatprep.subr.bf16.mxu0 0
          %1636 = vmatpush1.bf16.msra.mxu0 0
          %1637 = vmatprep.subr.bf16.mxu0 0
          %1638 = vmatpush1.bf16.msra.mxu0 0
          %1639 = vmatprep.subr.bf16.mxu0 0
          %1640 = vmatpush1.bf16.msra.mxu0 0
          %1641 = vmatprep.subr.bf16.mxu0 0
          %1642 = vmatpush1.bf16.msra.mxu0 0
          %1643 = vmatprep.subr.bf16.mxu0 0
          %1644 = vmatpush1.bf16.msra.mxu0 0
          %1645 = vmatprep.subr.bf16.mxu0 0
          %1646 = vmatpush1.bf16.msra.mxu0 0
          %1647 = vmatprep.subr.bf16.mxu0 0
          %1648 = vmatpush1.bf16.msra.mxu0 0
          %1649 = vmatprep.mubr.bf16.mxu0 0
          %1650 = vmatmul.mubr.bf16.gmra.mrb[0].mxu0 %v1612
          %v1651 = vpop.f32.mrb[0].mxu0
          %v1652 = vadd.f32 0.0, %v1651
          %v1653 = vpop.f32.mrb[0].mxu0
          %v1654 = vpop.f32.mrb[0].mxu0
          %v1655 = vpop.f32.mrb[0].mxu0
          %1656 = vdwg.mxu0
          %v1658 = vsel %vm1333, %v1332, 0
          %v1661 = vsel %vm1337, %v552, 0
          %1663 = vmatprep.subr.bf16.mxu0 0
          %1664 = vmatpush1.bf16.msra.mxu0 %v1661
          %1665 = vmatprep.subr.bf16.mxu0 0
          %1666 = vmatpush1.bf16.msra.mxu0 0
          %1667 = vmatprep.subr.bf16.mxu0 0
          %1668 = vmatpush1.bf16.msra.mxu0 0
          %1669 = vmatprep.subr.bf16.mxu0 0
          %1670 = vmatpush1.bf16.msra.mxu0 0
          %1671 = vmatprep.subr.bf16.mxu0 0
          %1672 = vmatpush1.bf16.msra.mxu0 0
          %1673 = vmatprep.subr.bf16.mxu0 0
          %1674 = vmatpush1.bf16.msra.mxu0 0
          %1675 = vmatprep.subr.bf16.mxu0 0
          %1676 = vmatpush1.bf16.msra.mxu0 0
          %1677 = vmatprep.subr.bf16.mxu0 0
          %1678 = vmatpush1.bf16.msra.mxu0 0
          %1679 = vmatprep.subr.bf16.mxu0 0
          %1680 = vmatpush1.bf16.msra.mxu0 0
          %1681 = vmatprep.subr.bf16.mxu0 0
          %1682 = vmatpush1.bf16.msra.mxu0 0
          %1683 = vmatprep.subr.bf16.mxu0 0
          %1684 = vmatpush1.bf16.msra.mxu0 0
          %1685 = vmatprep.subr.bf16.mxu0 0
          %1686 = vmatpush1.bf16.msra.mxu0 0
          %1687 = vmatprep.subr.bf16.mxu0 0
          %1688 = vmatpush1.bf16.msra.mxu0 0
          %1689 = vmatprep.subr.bf16.mxu0 0
          %1690 = vmatpush1.bf16.msra.mxu0 0
          %1691 = vmatprep.subr.bf16.mxu0 0
          %1692 = vmatpush1.bf16.msra.mxu0 0
          %1693 = vmatprep.subr.bf16.mxu0 0
          %1694 = vmatpush1.bf16.msra.mxu0 0
          %1695 = vmatprep.mubr.bf16.mxu0 0
          %1696 = vmatmul.mubr.bf16.gmra.mrb[0].mxu0 %v1658
          %v1697 = vpop.f32.mrb[0].mxu0
          %v1698 = vadd.f32 0.0, %v1697
          %v1699 = vpop.f32.mrb[0].mxu0
          %v1700 = vpop.f32.mrb[0].mxu0
          %v1701 = vpop.f32.mrb[0].mxu0
          %1702 = vdwg.mxu0
          %v1703 = vpack.c.bf16 %v1376, %v1376
          %v1704 = vpack.c.bf16 %v1422, %v1422
          %v1705 = vpack.c.bf16 %v1468, %v1468
          %v1706 = vpack.c.bf16 %v1514, %v1514
          %v1707 = vpack.c.bf16 %v1560, %v1560
          %v1708 = vpack.c.bf16 %v1606, %v1606
          %v1709 = vpack.c.bf16 %v1652, %v1652
          %v1710 = vpack.c.bf16 %v1698, %v1698
          %v1711 = vld [vmem:[#allocation11] sm:$0xf]
          %v1712 = vld [vmem:[#allocation11 + $0x4] sm:$0xf]
          %v1713 = vld [vmem:[#allocation11 + $0x8] sm:$0xf]
          %v1714 = vld [vmem:[#allocation11 + $0xc] sm:$0xf]
          %v1715 = vld [vmem:[#allocation11 + $0x10] sm:$0xf]
          %v1716 = vld [vmem:[#allocation11 + $0x14] sm:$0xf]
          %v1717 = vld [vmem:[#allocation11 + $0x18] sm:$0xf]
          %v1718 = vld [vmem:[#allocation11 + $0x1c] sm:$0xf]
          %v1719 = vld [vmem:[#allocation11 + $0x20] sm:$0xf]
          %v1720 = vld [vmem:[#allocation11 + $0x24] sm:$0xf]
          %v1721 = vld [vmem:[#allocation11 + $0x28] sm:$0xf]
          %v1722 = vld [vmem:[#allocation11 + $0x2c] sm:$0xf]
          %v1723 = vld [vmem:[#allocation11 + $0x30] sm:$0xf]
          %v1724 = vld [vmem:[#allocation11 + $0x34] sm:$0xf]
          %v1725 = vld [vmem:[#allocation11 + $0x38] sm:$0xf]
          %v1726 = vld [vmem:[#allocation11 + $0x3c] sm:$0xf]
          %v1727 = vld [vmem:[#allocation12] sm:$0xf]
          %v1728 = vld [vmem:[#allocation12 + $0x4] sm:$0xf]
          %v1729 = vld [vmem:[#allocation12 + $0x8] sm:$0xf]
          %v1730 = vld [vmem:[#allocation12 + $0xc] sm:$0xf]
          %v1731 = vld [vmem:[#allocation12 + $0x10] sm:$0xf]
          %v1732 = vld [vmem:[#allocation12 + $0x14] sm:$0xf]
          %v1733 = vld [vmem:[#allocation12 + $0x18] sm:$0xf]
          %v1734 = vld [vmem:[#allocation12 + $0x1c] sm:$0xf]
          %v1735 = vld [vmem:[#allocation12 + $0x20] sm:$0xf]
          %v1736 = vld [vmem:[#allocation12 + $0x24] sm:$0xf]
          %v1737 = vld [vmem:[#allocation12 + $0x28] sm:$0xf]
          %v1738 = vld [vmem:[#allocation12 + $0x2c] sm:$0xf]
          %v1739 = vld [vmem:[#allocation12 + $0x30] sm:$0xf]
          %v1740 = vld [vmem:[#allocation12 + $0x34] sm:$0xf]
          %v1741 = vld [vmem:[#allocation12 + $0x38] sm:$0xf]
          %v1742 = vld [vmem:[#allocation12 + $0x3c] sm:$0xf]
          %v1751 = vunpack.c.l.b16 %v1703
          %v1752 = vunpack.c.l.b16 %v1704
          %v1753 = vunpack.c.l.b16 %v1705
          %v1754 = vunpack.c.l.b16 %v1706
          %v1755 = vunpack.c.l.b16 %v1707
          %v1756 = vunpack.c.l.b16 %v1708
          %v1757 = vunpack.c.l.b16 %v1709
          %v1758 = vunpack.c.l.b16 %v1710
          %v1759 = vrot.slane %v1752, 7
          %vm1760 = vcmask 1041409
          %v1761 = vsel %vm1760, %v1759, %v1751
          %v1762 = vrot.slane %v1753, 6
          %vm1763 = vcmask 1042434
          %v1764 = vsel %vm1763, %v1762, %v1761
          %v1765 = vrot.slane %v1754, 5
          %vm1766 = vcmask 1043459
          %v1767 = vsel %vm1766, %v1765, %v1764
          %v1768 = vrot.slane %v1755, 4
          %vm1769 = vcmask 1044484
          %v1770 = vsel %vm1769, %v1768, %v1767
          %v1771 = vrot.slane %v1756, 3
          %vm1772 = vcmask 1045509
          %v1773 = vsel %vm1772, %v1771, %v1770
          %v1774 = vrot.slane %v1757, 2
          %vm1775 = vcmask 1046534
          %v1776 = vsel %vm1775, %v1774, %v1773
          %v1777 = vrot.slane %v1758, 1
          %vm1778 = vcmask 1047559
          %v1779 = vsel %vm1778, %v1777, %v1776
          %v1780 = vpack.c.b16 %v1779, %v1779
          %v1798 = vunpack.c.l.b16 %v1727
          %v1799 = vunpack.c.l.b16 %v1728
          %v1800 = vunpack.c.l.b16 %v1729
          %v1801 = vunpack.c.l.b16 %v1730
          %v1802 = vunpack.c.l.b16 %v1731
          %v1803 = vunpack.c.l.b16 %v1732
          %v1804 = vunpack.c.l.b16 %v1733
          %v1805 = vunpack.c.l.b16 %v1734
          %v1806 = vunpack.c.l.b16 %v1735
          %v1807 = vunpack.c.l.b16 %v1736
          %v1808 = vunpack.c.l.b16 %v1737
          %v1809 = vunpack.c.l.b16 %v1738
          %v1810 = vunpack.c.l.b16 %v1739
          %v1811 = vunpack.c.l.b16 %v1740
          %v1812 = vunpack.c.l.b16 %v1741
          %v1813 = vunpack.c.l.b16 %v1742
          %v1814 = vpack.c.b16 %v1799, %v1798
          %v1815 = vpack.c.b16 %v1801, %v1800
          %v1816 = vpack.c.b16 %v1803, %v1802
          %v1817 = vpack.c.b16 %v1805, %v1804
          %v1818 = vpack.c.b16 %v1807, %v1806
          %v1819 = vpack.c.b16 %v1809, %v1808
          %v1820 = vpack.c.b16 %v1811, %v1810
          %v1821 = vpack.c.b16 %v1813, %v1812
          %1830 = vmatprep.subr.bf16.mxu0 0
          %1831 = vmatpush1.bf16.msra.mxu0 %v1814
          %1832 = vmatprep.subr.bf16.mxu0 0
          %1833 = vmatpush1.bf16.msra.mxu0 %v1815
          %1834 = vmatprep.subr.bf16.mxu0 0
          %1835 = vmatpush1.bf16.msra.mxu0 %v1816
          %1836 = vmatprep.subr.bf16.mxu0 0
          %1837 = vmatpush1.bf16.msra.mxu0 %v1817
          %1838 = vmatprep.subr.bf16.mxu0 0
          %1839 = vmatpush1.bf16.msra.mxu0 %v1818
          %1840 = vmatprep.subr.bf16.mxu0 0
          %1841 = vmatpush1.bf16.msra.mxu0 %v1819
          %1842 = vmatprep.subr.bf16.mxu0 0
          %1843 = vmatpush1.bf16.msra.mxu0 %v1820
          %1844 = vmatprep.subr.bf16.mxu0 0
          %1845 = vmatpush1.bf16.msra.mxu0 %v1821
          %1846 = vmatprep.subr.bf16.mxu0 0
          %1847 = vmatpush1.bf16.msra.mxu0 0
          %1848 = vmatprep.subr.bf16.mxu0 0
          %1849 = vmatpush1.bf16.msra.mxu0 0
          %1850 = vmatprep.subr.bf16.mxu0 0
          %1851 = vmatpush1.bf16.msra.mxu0 0
          %1852 = vmatprep.subr.bf16.mxu0 0
          %1853 = vmatpush1.bf16.msra.mxu0 0
          %1854 = vmatprep.subr.bf16.mxu0 0
          %1855 = vmatpush1.bf16.msra.mxu0 0
          %1856 = vmatprep.subr.bf16.mxu0 0
          %1857 = vmatpush1.bf16.msra.mxu0 0
          %1858 = vmatprep.subr.bf16.mxu0 0
          %1859 = vmatpush1.bf16.msra.mxu0 0
          %1860 = vmatprep.subr.bf16.mxu0 0
          %1861 = vmatpush1.bf16.msra.mxu0 0
          %1862 = vmatprep.mubr.bf16.mxu0 0
          %1863 = vmatmul.mubr.bf16.gmra.mrb[0].mxu0 %v1780
          %v1864 = vpop.f32.mrb[0].mxu0
          %v1865 = vadd.f32 0.0, %v1864
          %v1866 = vpop.f32.mrb[0].mxu0
          %v1867 = vpop.f32.mrb[0].mxu0
          %v1868 = vpop.f32.mrb[0].mxu0
          %1869 = vdwg.mxu0
          %v1886 = vunpack.c.l.b16 %v1711
          %v1887 = vunpack.c.l.b16 %v1712
          %v1888 = vunpack.c.l.b16 %v1713
          %v1889 = vunpack.c.l.b16 %v1714
          %v1890 = vunpack.c.l.b16 %v1715
          %v1891 = vunpack.c.l.b16 %v1716
          %v1892 = vunpack.c.l.b16 %v1717
          %v1893 = vunpack.c.l.b16 %v1718
          %v1894 = vunpack.c.l.b16 %v1719
          %v1895 = vunpack.c.l.b16 %v1720
          %v1896 = vunpack.c.l.b16 %v1721
          %v1897 = vunpack.c.l.b16 %v1722
          %v1898 = vunpack.c.l.b16 %v1723
          %v1899 = vunpack.c.l.b16 %v1724
          %v1900 = vunpack.c.l.b16 %v1725
          %v1901 = vunpack.c.l.b16 %v1726
          %v1902 = vpack.c.b16 %v1887, %v1886
          %v1903 = vpack.c.b16 %v1889, %v1888
          %v1904 = vpack.c.b16 %v1891, %v1890
          %v1905 = vpack.c.b16 %v1893, %v1892
          %v1906 = vpack.c.b16 %v1895, %v1894
          %v1907 = vpack.c.b16 %v1897, %v1896
          %v1908 = vpack.c.b16 %v1899, %v1898
          %v1909 = vpack.c.b16 %v1901, %v1900
          %1918 = vmatprep.subr.bf16.mxu0 0
          %1919 = vmatpush1.bf16.msra.mxu0 %v1902
          %1920 = vmatprep.subr.bf16.mxu0 0
          %1921 = vmatpush1.bf16.msra.mxu0 %v1903
          %1922 = vmatprep.subr.bf16.mxu0 0
          %1923 = vmatpush1.bf16.msra.mxu0 %v1904
          %1924 = vmatprep.subr.bf16.mxu0 0
          %1925 = vmatpush1.bf16.msra.mxu0 %v1905
          %1926 = vmatprep.subr.bf16.mxu0 0
          %1927 = vmatpush1.bf16.msra.mxu0 %v1906
          %1928 = vmatprep.subr.bf16.mxu0 0
          %1929 = vmatpush1.bf16.msra.mxu0 %v1907
          %1930 = vmatprep.subr.bf16.mxu0 0
          %1931 = vmatpush1.bf16.msra.mxu0 %v1908
          %1932 = vmatprep.subr.bf16.mxu0 0
          %1933 = vmatpush1.bf16.msra.mxu0 %v1909
          %1934 = vmatprep.subr.bf16.mxu0 0
          %1935 = vmatpush1.bf16.msra.mxu0 0
          %1936 = vmatprep.subr.bf16.mxu0 0
          %1937 = vmatpush1.bf16.msra.mxu0 0
          %1938 = vmatprep.subr.bf16.mxu0 0
          %1939 = vmatpush1.bf16.msra.mxu0 0
          %1940 = vmatprep.subr.bf16.mxu0 0
          %1941 = vmatpush1.bf16.msra.mxu0 0
          %1942 = vmatprep.subr.bf16.mxu0 0
          %1943 = vmatpush1.bf16.msra.mxu0 0
          %1944 = vmatprep.subr.bf16.mxu0 0
          %1945 = vmatpush1.bf16.msra.mxu0 0
          %1946 = vmatprep.subr.bf16.mxu0 0
          %1947 = vmatpush1.bf16.msra.mxu0 0
          %1948 = vmatprep.subr.bf16.mxu0 0
          %1949 = vmatpush1.bf16.msra.mxu0 0
          %1950 = vmatprep.mubr.bf16.mxu0 0
          %1951 = vmatmul.mubr.bf16.gmra.mrb[0].mxu0 %v834
          %v1952 = vpop.f32.mrb[0].mxu0
          %v1953 = vadd.f32 %v1865, %v1952
          %v1954 = vpop.f32.mrb[0].mxu0
          %v1955 = vpop.f32.mrb[0].mxu0
          %v1956 = vpop.f32.mrb[0].mxu0
          %1957 = vdwg.mxu0
          %v1958 = vld [vmem:[%s7] sm:$0x1]
          %v1960 = vlaneseq
          %v1961 = vshrl.u32 %v1960, 7
          %v1962 = vsub.s32 0, %v1961
          %v1963 = vrot.slane %v1958, %v1962
          %v1965 = vadd.f32 %v1953, %v1963
          %v1966 = vtanh.pop %v1965
          %v1967 = vpack.c.bf16 %v1966, %v1966
          %1968 = vst [vmem:[#allocation2] sm:$0xf] %v1967
        $region92: #{tpu_custom_call.1} parent=59 // pred_fallthru
          _
        %v1969 = vld [vmem:[#allocation2] sm:$0xf]
        %v1970 = vld [vmem:[%s481] sm:$0xf]
        %v1971 = vld [vmem:[%s481 + $0x4] sm:$0xf]
        %v1972 = vld [vmem:[%s481 + $0x8] sm:$0xf]
        %v1973 = vld [vmem:[%s481 + $0xc] sm:$0xf]
        %v1974 = vld [vmem:[%s481 + $0x10] sm:$0xf]
        %v1975 = vld [vmem:[%s481 + $0x14] sm:$0xf]
        %v1976 = vld [vmem:[%s481 + $0x18] sm:$0xf]
        %v1977 = vld [vmem:[%s481 + $0x1c] sm:$0xf]
        %v1978 = vld [vmem:[%s481 + $0x20] sm:$0xf]
        %v1979 = vld [vmem:[%s481 + $0x24] sm:$0xf]
        %v1980 = vld [vmem:[%s481 + $0x28] sm:$0xf]
        %v1981 = vld [vmem:[%s481 + $0x2c] sm:$0xf]
        %v1982 = vld [vmem:[%s481 + $0x30] sm:$0xf]
        %v1983 = vld [vmem:[%s481 + $0x34] sm:$0xf]
        %v1984 = vld [vmem:[%s481 + $0x38] sm:$0xf]
        %v1985 = vld [vmem:[%s481 + $0x3c] sm:$0xf]
        %v1986 = vld [vmem:[%s533] sm:$0x1]
        %v1988 = vlaneseq
        %v1989 = vshrl.u32 %v1988, 7
        %v1990 = vsub.s32 0, %v1989
        %v1991 = vrot.slane %v1986, %v1990
        %v2009 = vunpack.c.l.b16 %v1970
        %v2010 = vunpack.c.l.b16 %v1971
        %v2011 = vunpack.c.l.b16 %v1972
        %v2012 = vunpack.c.l.b16 %v1973
        %v2013 = vunpack.c.l.b16 %v1974
        %v2014 = vunpack.c.l.b16 %v1975
        %v2015 = vunpack.c.l.b16 %v1976
        %v2016 = vunpack.c.l.b16 %v1977
        %v2017 = vunpack.c.l.b16 %v1978
        %v2018 = vunpack.c.l.b16 %v1979
        %v2019 = vunpack.c.l.b16 %v1980
        %v2020 = vunpack.c.l.b16 %v1981
        %v2021 = vunpack.c.l.b16 %v1982
        %v2022 = vunpack.c.l.b16 %v1983
        %v2023 = vunpack.c.l.b16 %v1984
        %v2024 = vunpack.c.l.b16 %v1985
        %v2025 = vpack.c.b16 %v2010, %v2009
        %v2026 = vpack.c.b16 %v2012, %v2011
        %v2027 = vpack.c.b16 %v2014, %v2013
        %v2028 = vpack.c.b16 %v2016, %v2015
        %v2029 = vpack.c.b16 %v2018, %v2017
        %v2030 = vpack.c.b16 %v2020, %v2019
        %v2031 = vpack.c.b16 %v2022, %v2021
        %v2032 = vpack.c.b16 %v2024, %v2023
        %2041 = vmatprep.subr.bf16.mxu0 0
        %2042 = vmatpush1.bf16.msra.mxu0 %v2025
        %2043 = vmatprep.subr.bf16.mxu0 0
        %2044 = vmatpush1.bf16.msra.mxu0 %v2026
        %2045 = vmatprep.subr.bf16.mxu0 0
        %2046 = vmatpush1.bf16.msra.mxu0 %v2027
        %2047 = vmatprep.subr.bf16.mxu0 0
        %2048 = vmatpush1.bf16.msra.mxu0 %v2028
        %2049 = vmatprep.subr.bf16.mxu0 0
        %2050 = vmatpush1.bf16.msra.mxu0 %v2029
        %2051 = vmatprep.subr.bf16.mxu0 0
        %2052 = vmatpush1.bf16.msra.mxu0 %v2030
        %2053 = vmatprep.subr.bf16.mxu0 0
        %2054 = vmatpush1.bf16.msra.mxu0 %v2031
        %2055 = vmatprep.subr.bf16.mxu0 0
        %2056 = vmatpush1.bf16.msra.mxu0 %v2032
        %2057 = vmatprep.subr.bf16.mxu0 0
        %2058 = vmatpush1.bf16.msra.mxu0 0
        %2059 = vmatprep.subr.bf16.mxu0 0
        %2060 = vmatpush1.bf16.msra.mxu0 0
        %2061 = vmatprep.subr.bf16.mxu0 0
        %2062 = vmatpush1.bf16.msra.mxu0 0
        %2063 = vmatprep.subr.bf16.mxu0 0
        %2064 = vmatpush1.bf16.msra.mxu0 0
        %2065 = vmatprep.subr.bf16.mxu0 0
        %2066 = vmatpush1.bf16.msra.mxu0 0
        %2067 = vmatprep.subr.bf16.mxu0 0
        %2068 = vmatpush1.bf16.msra.mxu0 0
        %2069 = vmatprep.subr.bf16.mxu0 0
        %2070 = vmatpush1.bf16.msra.mxu0 0
        %2071 = vmatprep.subr.bf16.mxu0 0
        %2072 = vmatpush1.bf16.msra.mxu0 0
        %2073 = vmatprep.mubr.bf16.mxu0 0
        %2074 = vmatmul.mubr.bf16.gmra.mrb[0].mxu0 %v1969
        %v2075 = vpop.f32.mrb[0].mxu0
        %v2076 = vadd.f32 %v1991, %v2075
        %v2077 = vpop.f32.mrb[0].mxu0
        %v2078 = vpop.f32.mrb[0].mxu0
        %v2079 = vpop.f32.mrb[0].mxu0
        %2080 = vdwg.mxu0
        %2081 = vst [vmem:[%s521] sm:$0xff] %v2076
        %s2082 = sand.u32 %s279, 1
        %s2083 = scalar_lea.sflag [#allocation5], %s2082
        %s2084 = sand.u32 %s279, 1
        %s2085 = smul.addr %s2084, 8
        %s2086 = scalar_lea.vmem [#allocation15], %s2085
        %s2087 = sand.u32 %s305, 1
        %s2088 = scalar_lea.sflag [#allocation17], %s2087
        %s2089 = sand.u32 %s305, 1
        %s2090 = smul.addr %s2089, 8
        %s2091 = scalar_lea.vmem [#allocation16], %s2090
        // Predicated region
        $region93: #{tpu_custom_call.1} parent=59 // pred_check
          %p2092 = pneg %p289
        $region94: #{tpu_custom_call.1} parent=59 // pred_check_branch
          %2094 = sbr.rel (%p2092) target = $region96
        $region95: #{tpu_custom_call.1} parent=59 // pred_region
          %s2095 = sadd.s32 %s37, %s38
          %s2097 = ssub.s32 128, 128
          %2098 = vsyncadd %s2083, %s2097
          %s2099 = smul.addr %s2095, 128
          %s2100 = scalar_lea.hbm %s10, %s2099
          %s2102 = sshll.u32 %s2086, 4
          %s2103 = int_to_ptr.vmem [resolvable:$true] %s2102
          %2105 = dma.vmem_to_hbm [thread:$0]  %s2103, 128, %s2100, %s2083
        $region96: #{tpu_custom_call.1} parent=59 // pred_fallthru
          _
        // Predicated region
        $region97: #{tpu_custom_call.1} parent=59 // pred_check
          %p2106 = pneg %p315
        $region98: #{tpu_custom_call.1} parent=59 // pred_check_branch
          %2108 = sbr.rel (%p2106) target = $region100
        $region99: #{tpu_custom_call.1} parent=59 // pred_region
          %s2110 = ssub.s32 128, 128
          %2111 = vsyncadd %s2088, %s2110
          %s2112 = smul.addr %s37, 128
          %s2113 = scalar_lea.hbm %s11, %s2112
          %s2115 = sshll.u32 %s2091, 4
          %s2116 = int_to_ptr.vmem [resolvable:$true] %s2115
          %2118 = dma.vmem_to_hbm [thread:$0]  %s2116, 128, %s2113, %s2088
        $region100: #{tpu_custom_call.1} parent=59 // pred_fallthru
          _
      $region60: #{tpu_custom_call.1} parent=5 // pred_fallthru
        _
      %p2119 = scmp.le.s32.totalorder 2, %s28
      // Predicated region
      $region101: #{tpu_custom_call.1} parent=5 // pred_check
        %p2120 = pneg %p2119
      $region102: #{tpu_custom_call.1} parent=5 // pred_check_branch
        %2122 = sbr.rel (%p2120) target = $region104
      $region103: #{tpu_custom_call.1} parent=5 // pred_region
        %s2123 = ssub.s32 %s28, 2
        // Predicated region
        $region105: #{tpu_custom_call.1} parent=103 // pred_check
          %p2124 = pneg %p295
        $region106: #{tpu_custom_call.1} parent=103 // pred_check_branch
          %2126 = sbr.rel (%p2124) target = $region108
        $region107: #{tpu_custom_call.1} parent=103 // pred_region
          %s2127 = sand.u32 %s280, 1
          %s2128 = scalar_lea.sflag [#allocation5], %s2127
          %s2129 = sand.u32 %s280, 1
          %s2130 = smul.addr %s2129, 8
          %s2131 = scalar_lea.vmem [#allocation15], %s2130
          %2132 = dma.done %s2128, 128
        $region108: #{tpu_custom_call.1} parent=103 // pred_fallthru
          _
        // Predicated region
        $region109: #{tpu_custom_call.1} parent=103 // pred_check
          %p2133 = pneg %p321
        $region110: #{tpu_custom_call.1} parent=103 // pred_check_branch
          %2135 = sbr.rel (%p2133) target = $region112
        $region111: #{tpu_custom_call.1} parent=103 // pred_region
          %s2136 = sand.u32 %s306, 1
          %s2137 = scalar_lea.sflag [#allocation17], %s2136
          %s2138 = sand.u32 %s306, 1
          %s2139 = smul.addr %s2138, 8
          %s2140 = scalar_lea.vmem [#allocation16], %s2139
          %2141 = dma.done %s2137, 128
        $region112: #{tpu_custom_call.1} parent=103 // pred_fallthru
          _
      $region104: #{tpu_custom_call.1} parent=5 // pred_fallthru
        _
    $region6: #{tpu_custom_call.1} parent=1 // loop_footer
      %s32 = sadd.s32 1, %s28
    $region7: #{tpu_custom_call.1} parent=1 // loop_footer_branch
      %27 = sbr.rel target = $region3
    $region8: #{tpu_custom_call.1} parent=1 // loop_exit
      _
    %2142 = vsyncpa [#allocation4], 1
    %s2143 = scalar_lea.sflag [#allocation4], 1
    %2144 = vsyncpa %s2143, 1
    %2145 = vsyncpa [#allocation7], 1
    %2146 = vsyncpa [#allocation10], 1
    %2147 = vsyncpa [#allocation13], 1
    %2148 = vsyncpa [#allocation5], 1
    %s2149 = scalar_lea.sflag [#allocation5], 1
    %2150 = vsyncpa %s2149, 1
    %2151 = vsyncpa [#allocation17], 1
    %s2152 = scalar_lea.sflag [#allocation17], 1
    %2153 = vsyncpa %s2152, 1

</llo_original>
